<compile_context>
chip_gen: v7x
topology: tpu7x:2x2x1
jax: 0.10.0
libtpu: 0.0.40
codegen_flags: <defaults>
</compile_context>

<pallas_src>
import functools

import jax
import jax.numpy as jnp
import numpy as np
from jax.experimental import pallas as pl
from jax.experimental.pallas import tpu as pltpu


# --------------------------------------------------------------------------
# helpers
# --------------------------------------------------------------------------
def _round_up(x, m):
    return (x + m - 1) // m * m


def _pick_tile_r(R, bytes_per_row, max_tile_r=512, vmem_budget=8 * 1024 * 1024):
    """Row-tile size: as large as fits the VMEM budget (double-buffered), capped
    at max_tile_r, multiple of 8, and leaving >=2 grid steps when R allows it
    (so parallel grid axes can shard across v7x's two TensorCores)."""
    fit = min(max_tile_r, vmem_budget // max(bytes_per_row, 1))
    fit = max(8, (fit // 8) * 8)
    half = max(8, _round_up((R + 1) // 2, 8))
    return min(fit, half)


_VMEM_LIMIT = 32 * 1024 * 1024  # safe on v5e/v6e/v7x, raises v5e's 16 MiB default


# --------------------------------------------------------------------------
# Pallas kernel 1: per-Fourier-mode complex channel mixing.
#   For each mode m:  [xr|xi] @ [[wr, wi], [-wi, wr]]  ->  [out_r | out_i]
#   (single real matmul per mode: K = 2*I, N = 2*O)
# --------------------------------------------------------------------------
def _spectral_mix_kernel(x_ref, w_ref, o_ref):
    # x_ref: [tile_r, modes*2I]   w_ref: [modes, 2I, 2O]   o_ref: [tile_r, modes*2O]
    modes, i2, _ = w_ref.shape
    x = x_ref[...]
    ys = []
    for m in range(modes):  # modes is a small static int -> fully unrolled
        xm = x[:, m * i2:(m + 1) * i2]
        ys.append(jnp.dot(xm, w_ref[m], preferred_element_type=jnp.float32))
    # one lane-dense store for the whole tile
    o_ref[...] = ys[0] if modes == 1 else jnp.concatenate(ys, axis=-1)


def spectral_mix(x_ri, w_ri, *, max_tile_r=512):
    """x_ri: [R, modes*2I] f32 ([real_I | imag_I] per mode, modes contiguous);
       w_ri: [modes, 2I, 2O] f32 block-complex weights;
       returns [R, modes*2O] f32 ([real_O | imag_O] per mode)."""
    R, K = x_ri.shape
    modes, i2, o2 = w_ri.shape
    assert K == modes * i2
    n_out = modes * o2

    bytes_per_row = 2 * (K + n_out) * 4  # double-buffered in + out rows
    tile_r = _pick_tile_r(R, bytes_per_row, max_tile_r=max_tile_r)
    Rp = _round_up(R, tile_r)
    if Rp != R:
        x_ri = jnp.pad(x_ri, ((0, Rp - R), (0, 0)))

    out = pl.pallas_call(
        _spectral_mix_kernel,
        out_shape=jax.ShapeDtypeStruct((Rp, n_out), jnp.float32),
        grid=(Rp // tile_r,),
        in_specs=[
            pl.BlockSpec((tile_r, K), lambda i: (i, 0)),         # streamed rows
            pl.BlockSpec((modes, i2, o2), lambda i: (0, 0, 0)),  # resident weights
        ],
        out_specs=pl.BlockSpec((tile_r, n_out), lambda i: (i, 0)),
        compiler_params=pltpu.CompilerParams(
            dimension_semantics=("parallel",),
            vmem_limit_bytes=_VMEM_LIMIT),
    )(x_ri, w_ri)
    return out[:R] if Rp != R else out


# --------------------------------------------------------------------------
# Pallas kernel 2: fused 2-layer FeedForward (Linear -> ReLU -> Linear).
# --------------------------------------------------------------------------
def _ff_kernel(x_ref, w1_ref, b1_ref, w2_ref, b2_ref, o_ref):
    h = jnp.dot(x_ref[...], w1_ref[...], preferred_element_type=jnp.float32)
    h = jnp.maximum(h + b1_ref[...], 0.0)
    y = jnp.dot(h, w2_ref[...], preferred_element_type=jnp.float32) + b2_ref[...]
    o_ref[...] = y.astype(o_ref.dtype)


def feed_forward(x2d, w1, b1, w2, b2, *, max_tile_r=512):
    """x2d: [R, D_in]; w1: [D_in, H]; b1: [1, H]; w2: [H, D_out]; b2: [1, D_out]."""
    R, D_in = x2d.shape
    H = w1.shape[1]
    D_out = w2.shape[1]

    bytes_per_row = (2 * D_in + 2 * D_out + H) * 4
    tile_r = _pick_tile_r(R, bytes_per_row, max_tile_r=max_tile_r)
    Rp = _round_up(R, tile_r)
    if Rp != R:  # ragged tail handled by padding (sliced off below)
        x2d = jnp.pad(x2d, ((0, Rp - R), (0, 0)))

    out = pl.pallas_call(
        _ff_kernel,
        out_shape=jax.ShapeDtypeStruct((Rp, D_out), x2d.dtype),
        grid=(Rp // tile_r,),
        in_specs=[
            pl.BlockSpec((tile_r, D_in), lambda i: (i, 0)),  # streamed rows
            pl.BlockSpec((D_in, H), lambda i: (0, 0)),       # resident weights
            pl.BlockSpec((1, H), lambda i: (0, 0)),
            pl.BlockSpec((H, D_out), lambda i: (0, 0)),
            pl.BlockSpec((1, D_out), lambda i: (0, 0)),
        ],
        out_specs=pl.BlockSpec((tile_r, D_out), lambda i: (i, 0)),
        compiler_params=pltpu.CompilerParams(
            dimension_semantics=("parallel",),
            vmem_limit_bytes=_VMEM_LIMIT),
    )(x2d, w1, b1, w2, b2)
    return out[:R] if Rp != R else out


# --------------------------------------------------------------------------
# forward_fourier: FFT (XLA) + weighted mode selection (Pallas) + IFFT (XLA),
# all in channels-last layout (no [B,I,M,N] transposes).
# --------------------------------------------------------------------------
def forward_fourier(x, wy_ri, wx_ri, modes_x, modes_y):
    B, M, N, I = x.shape
    O = wy_ri.shape[-1] // 2

    # ---- y direction (FFT over N = axis 2) ----
    x_fty = jnp.fft.rfft(x, axis=2, norm="ortho")                # [B, M, N//2+1, I]
    xk = x_fty[:, :, :modes_y, :]                                # [B, M, my, I]
    x_ri = jnp.concatenate([jnp.real(xk), jnp.imag(xk)], axis=-1)  # [B, M, my, 2I]
    o_ri = spectral_mix(x_ri.reshape(B * M, modes_y * 2 * I), wy_ri)
    o_ri = o_ri.reshape(B, M, modes_y, 2 * O)
    oc = jax.lax.complex(o_ri[..., :O], o_ri[..., O:])           # [B, M, my, O]
    out_ft_y = jnp.pad(oc, ((0, 0), (0, 0), (0, N // 2 + 1 - modes_y), (0, 0)))
    xy = jnp.fft.irfft(out_ft_y, n=N, axis=2, norm="ortho")      # [B, M, N, O]

    # ---- x direction (FFT over M = axis 1) ----
    x_ftx = jnp.fft.rfft(x, axis=1, norm="ortho")                # [B, M//2+1, N, I]
    xk = x_ftx[:, :modes_x, :, :]                                # [B, mx, N, I]
    xk = jnp.transpose(xk, (0, 2, 1, 3))                         # small: mx modes only
    x_ri = jnp.concatenate([jnp.real(xk), jnp.imag(xk)], axis=-1)  # [B, N, mx, 2I]
    o_ri = spectral_mix(x_ri.reshape(B * N, modes_x * 2 * I), wx_ri)
    o_ri = o_ri.reshape(B, N, modes_x, 2 * O)
    oc = jax.lax.complex(o_ri[..., :O], o_ri[..., O:])           # [B, N, mx, O]
    oc = jnp.transpose(oc, (0, 2, 1, 3))                         # [B, mx, N, O]
    out_ft_x = jnp.pad(oc, ((0, 0), (0, M // 2 + 1 - modes_x), (0, 0), (0, 0)))
    xx = jnp.fft.irfft(out_ft_x, n=M, axis=1, norm="ortho")      # [B, M, N, O]

    return xx + xy                                               # channels-last already


# --------------------------------------------------------------------------
# Full SpectralConv2d forward (mode='full', use_fork=False)
# --------------------------------------------------------------------------
def spectral_conv2d_forward(x, params, modes_x, modes_y):
    x = forward_fourier(x, params["wy_ri"], params["wx_ri"], modes_x, modes_y)
    B, M, N, O = x.shape
    b2d = feed_forward(x.reshape(B * M * N, O),
                       params["w1"], params["b1"], params["w2"], params["b2"])
    b = b2d.reshape(B, M, N, -1)
    f = None  # use_fork=False
    return b, f


# --------------------------------------------------------------------------
# Parameter init (mirrors the module's __init__ shapes) + weight pre-packing.
# --------------------------------------------------------------------------
def _complex_block_weight(w):
    """w: (I, O, modes, 2) torch-style complex weight -> [modes, 2I, 2O] real
    block matrix [[wr, wi], [-wi, wr]] so the complex mix is one real matmul."""
    wr = jnp.transpose(w[..., 0], (2, 0, 1))    # [modes, I, O]
    wi = jnp.transpose(w[..., 1], (2, 0, 1))
    top = jnp.concatenate([wr, wi], axis=-1)    # [modes, I, 2O]
    bot = jnp.concatenate([-wi, wr], axis=-1)
    return jnp.concatenate([top, bot], axis=1)  # [modes, 2I, 2O]


def init_params(key, in_dim, out_dim, modes_x, modes_y, factor=4):
    ks = jax.random.split(key, 6)

    def xavier_normal(k, shape):
        # torch xavier_normal_ on (in_dim, out_dim, modes, 2)
        fan_in = shape[1] * shape[2] * shape[3]
        fan_out = shape[0] * shape[2] * shape[3]
        std = (2.0 / (fan_in + fan_out)) ** 0.5
        return std * jax.random.normal(k, shape, dtype=jnp.float32)

    w_x = xavier_normal(ks[0], (in_dim, out_dim, modes_x, 2))
    w_y = xavier_normal(ks[1], (in_dim, out_dim, modes_y, 2))

    hidden = out_dim * factor

    def linear_init(kw, kb, d_in, d_out):
        bound = (1.0 / d_in) ** 0.5
        kw1, _ = jax.random.split(kw)
        w = jax.random.uniform(kw1, (d_in, d_out), jnp.float32, -bound, bound)
        b = jax.random.uniform(kb, (1, d_out), jnp.float32, -bound, bound)
        return w, b

    w1, b1 = linear_init(ks[2], ks[3], out_dim, hidden)
    w2, b2 = linear_init(ks[4], ks[5], hidden, out_dim)

    return dict(
        w_x_raw=w_x, w_y_raw=w_y,                         # kept for the reference check
        wx_ri=_complex_block_weight(w_x),                 # [mx, 2I, 2O]
        wy_ri=_complex_block_weight(w_y),                 # [my, 2I, 2O]
        w1=w1, b1=b1, w2=w2, b2=b2)


# --------------------------------------------------------------------------
# Pure-JAX reference (mirrors the PyTorch module) for a correctness check.
# --------------------------------------------------------------------------
def reference_forward(x, params, modes_x, modes_y):
    hp = jax.lax.Precision.HIGHEST
    xt = jnp.transpose(x, (0, 3, 1, 2))                           # [B, I, M, N]
    B, I, M, N = xt.shape
    wy_c = params["w_y_raw"][..., 0] + 1j * params["w_y_raw"][..., 1]  # [I, O, my]
    wx_c = params["w_x_raw"][..., 0] + 1j * params["w_x_raw"][..., 1]  # [I, O, mx]
    O = wy_c.shape[1]

    x_fty = jnp.fft.rfft(xt, axis=-1, norm="ortho")
    out_ft = jnp.zeros((B, O, M, N // 2 + 1), jnp.complex64)
    out_ft = out_ft.at[..., :modes_y].set(
        jnp.einsum("bixy,ioy->boxy", x_fty[..., :modes_y], wy_c, precision=hp))
    xy = jnp.fft.irfft(out_ft, n=N, axis=-1, norm="ortho")

    x_ftx = jnp.fft.rfft(xt, axis=-2, norm="ortho")
    out_ft = jnp.zeros((B, O, M // 2 + 1, N), jnp.complex64)
    out_ft = out_ft.at[:, :, :modes_x, :].set(
        jnp.einsum("bixy,iox->boxy", x_ftx[:, :, :modes_x, :], wx_c, precision=hp))
    xx = jnp.fft.irfft(out_ft, n=M, axis=-2, norm="ortho")

    xf = jnp.transpose(xx + xy, (0, 2, 3, 1))                     # [B, M, N, O]
    h = jnp.maximum(
        jnp.einsum("...i,ij->...j", xf, params["w1"], precision=hp) + params["b1"][0],
        0.0)
    return jnp.einsum("...i,ij->...j", h, params["w2"], precision=hp) + params["b2"][0]


# --------------------------------------------------------------------------
if __name__ == "__main__":
    B, G, C = 2, 16, 4            # batch, grid_size, in_dim == out_dim
    modes_x, modes_y = 4, 4

    key = jax.random.PRNGKey(0)
    kx, kp = jax.random.split(key)
    x = jax.random.normal(kx, (B, G, G, C), dtype=jnp.float32)
    params = init_params(kp, C, C, modes_x, modes_y, factor=4)

    fwd = jax.jit(functools.partial(spectral_conv2d_forward,
                                    modes_x=modes_x, modes_y=modes_y))
    b_out, f_out = fwd(x, params)
    jax.block_until_ready(b_out)

    assert b_out.shape == (B, G, G, C), b_out.shape
    assert b_out.dtype == jnp.float32
    assert f_out is None

    # numerical check against the pure-JAX reference of the PyTorch module
    ref = reference_forward(x, params, modes_x, modes_y)
    np.testing.assert_allclose(np.asarray(b_out), np.asarray(ref),
                               rtol=2e-2, atol=2e-3)
    print("KERNEL_OK")
</pallas_src>

<mosaic_0001>
module attributes {stable_mosaic.version = 11 : i64} {
  func.func @_spectral_mix_kernel(%arg0: i32, %arg1: memref<16x32xf32, #tpu.memory_space<vmem>>, %arg2: memref<4x8x8xf32, #tpu.memory_space<vmem>>, %arg3: memref<16x32xf32, #tpu.memory_space<vmem>>) attributes {dimension_semantics = [#tpu.dimension_semantics<parallel>], iteration_bounds = array<i64: 2>, scalar_prefetch = 0 : i64, scratch_operands = 0 : i64, tpu.core_type = #tpu.core_type<tc>, window_params = [{transform_indices = @transform_0, window_bounds = array<i64: 16, 32>}, {pipeline_mode = #tpu.pipeline_mode<synchronous>, transform_indices = @transform_1, window_bounds = array<i64: 4, 8, 8>}, {transform_indices = @transform_2, window_bounds = array<i64: 16, 32>}]} {
    %c0 = arith.constant 0 : index
    %c0_0 = arith.constant 0 : index
    %0 = vector.load %arg1[%c0, %c0_0] : memref<16x32xf32, #tpu.memory_space<vmem>>, vector<16x32xf32>
    %1 = vector.extract_strided_slice %0 {offsets = [0, 0], sizes = [16, 8], strides = [1, 1]} : vector<16x32xf32> to vector<16x8xf32>
    %c0_1 = arith.constant 0 : index
    %c0_2 = arith.constant 0 : index
    %c0_3 = arith.constant 0 : index
    %2 = vector.load %arg2[%c0_1, %c0_2, %c0_3] : memref<4x8x8xf32, #tpu.memory_space<vmem>>, vector<1x8x8xf32>
    %3 = vector.shape_cast %2 : vector<1x8x8xf32> to vector<8x8xf32>
    %cst = arith.constant dense<0.000000e+00> : vector<16x8xf32>
    %4 = tpu.matmul %1, %3, %cst {dimension_numbers = #tpu.dot_dimension_numbers<[1], [0], [0], [1], [0, 0, 1, 1], [], []>} : vector<16x8xf32>, vector<8x8xf32>, vector<16x8xf32> -> vector<16x8xf32>
    %5 = vector.extract_strided_slice %0 {offsets = [0, 8], sizes = [16, 8], strides = [1, 1]} : vector<16x32xf32> to vector<16x8xf32>
    %c1 = arith.constant 1 : index
    %c0_4 = arith.constant 0 : index
    %c0_5 = arith.constant 0 : index
    %6 = vector.load %arg2[%c1, %c0_4, %c0_5] : memref<4x8x8xf32, #tpu.memory_space<vmem>>, vector<1x8x8xf32>
    %7 = vector.shape_cast %6 : vector<1x8x8xf32> to vector<8x8xf32>
    %cst_6 = arith.constant dense<0.000000e+00> : vector<16x8xf32>
    %8 = tpu.matmul %5, %7, %cst_6 {dimension_numbers = #tpu.dot_dimension_numbers<[1], [0], [0], [1], [0, 0, 1, 1], [], []>} : vector<16x8xf32>, vector<8x8xf32>, vector<16x8xf32> -> vector<16x8xf32>
    %9 = vector.extract_strided_slice %0 {offsets = [0, 16], sizes = [16, 8], strides = [1, 1]} : vector<16x32xf32> to vector<16x8xf32>
    %c2 = arith.constant 2 : index
    %c0_7 = arith.constant 0 : index
    %c0_8 = arith.constant 0 : index
    %10 = vector.load %arg2[%c2, %c0_7, %c0_8] : memref<4x8x8xf32, #tpu.memory_space<vmem>>, vector<1x8x8xf32>
    %11 = vector.shape_cast %10 : vector<1x8x8xf32> to vector<8x8xf32>
    %cst_9 = arith.constant dense<0.000000e+00> : vector<16x8xf32>
    %12 = tpu.matmul %9, %11, %cst_9 {dimension_numbers = #tpu.dot_dimension_numbers<[1], [0], [0], [1], [0, 0, 1, 1], [], []>} : vector<16x8xf32>, vector<8x8xf32>, vector<16x8xf32> -> vector<16x8xf32>
    %13 = vector.extract_strided_slice %0 {offsets = [0, 24], sizes = [16, 8], strides = [1, 1]} : vector<16x32xf32> to vector<16x8xf32>
    %c3 = arith.constant 3 : index
    %c0_10 = arith.constant 0 : index
    %c0_11 = arith.constant 0 : index
    %14 = vector.load %arg2[%c3, %c0_10, %c0_11] : memref<4x8x8xf32, #tpu.memory_space<vmem>>, vector<1x8x8xf32>
    %15 = vector.shape_cast %14 : vector<1x8x8xf32> to vector<8x8xf32>
    %cst_12 = arith.constant dense<0.000000e+00> : vector<16x8xf32>
    %16 = tpu.matmul %13, %15, %cst_12 {dimension_numbers = #tpu.dot_dimension_numbers<[1], [0], [0], [1], [0, 0, 1, 1], [], []>} : vector<16x8xf32>, vector<8x8xf32>, vector<16x8xf32> -> vector<16x8xf32>
    %17 = tpu.concatenate %4, %8, %12, %16 in 1 : vector<16x8xf32>, vector<16x8xf32>, vector<16x8xf32>, vector<16x8xf32> -> vector<16x32xf32>
    %c0_13 = arith.constant 0 : index
    %c0_14 = arith.constant 0 : index
    %18 = vector.load %arg3[%c0_13, %c0_14] : memref<16x32xf32, #tpu.memory_space<vmem>>, vector<16x32xf32>
    tpu.vector_store %arg3[%c0_13, %c0_14], %17 {strides = array<i32>} : memref<16x32xf32, #tpu.memory_space<vmem>>, vector<16x32xf32>,
    return
  }
  func.func @transform_0(%arg0: i32) -> (i32, i32) {
    %c0_i32 = arith.constant 0 : i32
    %c0_i32_0 = arith.constant 0 : i32
    return %arg0, %c0_i32 : i32, i32
  }
  func.func @transform_1(%arg0: i32) -> (i32, i32, i32) {
    %c0_i32 = arith.constant 0 : i32
    %c0_i32_0 = arith.constant 0 : i32
    %c0_i32_1 = arith.constant 0 : i32
    %c0_i32_2 = arith.constant 0 : i32
    return %c0_i32, %c0_i32_0, %c0_i32_1 : i32, i32, i32
  }
  func.func @transform_2(%arg0: i32) -> (i32, i32) {
    %c0_i32 = arith.constant 0 : i32
    %c0_i32_0 = arith.constant 0 : i32
    return %arg0, %c0_i32 : i32, i32
  }
}

module attributes {stable_mosaic.version = 11 : i64} {
  func.func @_ff_kernel(%arg0: i32, %arg1: memref<256x4xf32, #tpu.memory_space<vmem>>, %arg2: memref<4x16xf32, #tpu.memory_space<vmem>>, %arg3: memref<1x16xf32, #tpu.memory_space<vmem>>, %arg4: memref<16x4xf32, #tpu.memory_space<vmem>>, %arg5: memref<1x4xf32, #tpu.memory_space<vmem>>, %arg6: memref<256x4xf32, #tpu.memory_space<vmem>>) attributes {dimension_semantics = [#tpu.dimension_semantics<parallel>], iteration_bounds = array<i64: 2>, scalar_prefetch = 0 : i64, scratch_operands = 0 : i64, tpu.core_type = #tpu.core_type<tc>, window_params = [{transform_indices = @transform_0, window_bounds = array<i64: 256, 4>}, {pipeline_mode = #tpu.pipeline_mode<synchronous>, transform_indices = @transform_1, window_bounds = array<i64: 4, 16>}, {pipeline_mode = #tpu.pipeline_mode<synchronous>, transform_indices = @transform_2, window_bounds = array<i64: 1, 16>}, {pipeline_mode = #tpu.pipeline_mode<synchronous>, transform_indices = @transform_3, window_bounds = array<i64: 16, 4>}, {pipeline_mode = #tpu.pipeline_mode<synchronous>, transform_indices = @transform_4, window_bounds = array<i64: 1, 4>}, {transform_indices = @transform_5, window_bounds = array<i64: 256, 4>}]} {
    %c0 = arith.constant 0 : index
    %c0_0 = arith.constant 0 : index
    %0 = vector.load %arg1[%c0, %c0_0] : memref<256x4xf32, #tpu.memory_space<vmem>>, vector<256x4xf32>
    %c0_1 = arith.constant 0 : index
    %c0_2 = arith.constant 0 : index
    %1 = vector.load %arg2[%c0_1, %c0_2] : memref<4x16xf32, #tpu.memory_space<vmem>>, vector<4x16xf32>
    %cst = arith.constant dense<0.000000e+00> : vector<256x16xf32>
    %2 = tpu.matmul %0, %1, %cst {dimension_numbers = #tpu.dot_dimension_numbers<[1], [0], [0], [1], [0, 0, 1, 1], [], []>} : vector<256x4xf32>, vector<4x16xf32>, vector<256x16xf32> -> vector<256x16xf32>
    %c0_3 = arith.constant 0 : index
    %c0_4 = arith.constant 0 : index
    %3 = vector.load %arg3[%c0_3, %c0_4] : memref<1x16xf32, #tpu.memory_space<vmem>>, vector<1x16xf32>
    %4 = vector.broadcast %3 : vector<1x16xf32> to vector<256x16xf32>
    %5 = arith.addf %2, %4 : vector<256x16xf32>
    %cst_5 = arith.constant 0.000000e+00 : f32
    %6 = vector.broadcast %cst_5 : f32 to vector<256x16xf32>
    %7 = arith.maximumf %5, %6 : vector<256x16xf32>
    %c0_6 = arith.constant 0 : index
    %c0_7 = arith.constant 0 : index
    %8 = vector.load %arg4[%c0_6, %c0_7] : memref<16x4xf32, #tpu.memory_space<vmem>>, vector<16x4xf32>
    %cst_8 = arith.constant dense<0.000000e+00> : vector<256x4xf32>
    %9 = tpu.matmul %7, %8, %cst_8 {dimension_numbers = #tpu.dot_dimension_numbers<[1], [0], [0], [1], [0, 0, 1, 1], [], []>} : vector<256x16xf32>, vector<16x4xf32>, vector<256x4xf32> -> vector<256x4xf32>
    %c0_9 = arith.constant 0 : index
    %c0_10 = arith.constant 0 : index
    %10 = vector.load %arg5[%c0_9, %c0_10] : memref<1x4xf32, #tpu.memory_space<vmem>>, vector<1x4xf32>
    %11 = vector.broadcast %10 : vector<1x4xf32> to vector<256x4xf32>
    %12 = arith.addf %9, %11 : vector<256x4xf32>
    %c0_11 = arith.constant 0 : index
    %c0_12 = arith.constant 0 : index
    %13 = vector.load %arg6[%c0_11, %c0_12] : memref<256x4xf32, #tpu.memory_space<vmem>>, vector<256x4xf32>
    tpu.vector_store %arg6[%c0_11, %c0_12], %12 {strides = array<i32>} : memref<256x4xf32, #tpu.memory_space<vmem>>, vector<256x4xf32>,
    return
  }
  func.func @transform_0(%arg0: i32) -> (i32, i32) {
    %c0_i32 = arith.constant 0 : i32
    %c0_i32_0 = arith.constant 0 : i32
    return %arg0, %c0_i32 : i32, i32
  }
  func.func @transform_1(%arg0: i32) -> (i32, i32) {
    %c0_i32 = arith.constant 0 : i32
    %c0_i32_0 = arith.constant 0 : i32
    %c0_i32_1 = arith.constant 0 : i32
    return %c0_i32, %c0_i32_0 : i32, i32
  }
  func.func @transform_2(%arg0: i32) -> (i32, i32) {
    %c0_i32 = arith.constant 0 : i32
    %c0_i32_0 = arith.constant 0 : i32
    %c0_i32_1 = arith.constant 0 : i32
    return %c0_i32, %c0_i32_0 : i32, i32
  }
  func.func @transform_3(%arg0: i32) -> (i32, i32) {
    %c0_i32 = arith.constant 0 : i32
    %c0_i32_0 = arith.constant 0 : i32
    %c0_i32_1 = arith.constant 0 : i32
    return %c0_i32, %c0_i32_0 : i32, i32
  }
  func.func @transform_4(%arg0: i32) -> (i32, i32) {
    %c0_i32 = arith.constant 0 : i32
    %c0_i32_0 = arith.constant 0 : i32
    %c0_i32_1 = arith.constant 0 : i32
    return %c0_i32, %c0_i32_0 : i32, i32
  }
  func.func @transform_5(%arg0: i32) -> (i32, i32) {
    %c0_i32 = arith.constant 0 : i32
    %c0_i32_0 = arith.constant 0 : i32
    return %arg0, %c0_i32 : i32, i32
  }
}

</mosaic_0001>

<llo_original>
// kernel: reverse.5
$region0: #{reverse.5}
  %s0 = inlined_call_operand.vmem [shape: f32[2,16,4,7], index: 0, kind: input, shape index: {}]
  %s1 = inlined_call_operand.vmem [shape: f32[2,16,4,7], index: 1, kind: output, shape index: {}]
  %v2 = vlaneseq
  %v3 = vsub.s32 6, %v2
  %4 = vset.pattern.permute.xlu0 %v3
  $region1: #{reverse.5} parent=0
    #allocation0 [shape = 'u8[65536]{0}', space=vmem, size = 0x10000, scoped, tag = 'operand span for operand 0']
    #allocation1 [shape = 'u8[65536]{0}', space=vmem, size = 0x10000, scoped, tag = 'operand span for operand 1']
    // Predicated region
    $region2: #{reverse.5} parent=1 // pred_check
      _
    $region3: #{reverse.5} parent=1 // pred_check_branch
      %6 = sbr.rel (0) target = $region5
    $region4: #{reverse.5} parent=1 // pred_region
      // Predicated region
      $region6: #{reverse.5} parent=4 // pred_check
        _
      $region7: #{reverse.5} parent=4 // pred_check_branch
        %8 = sbr.rel (0) target = $region9
      $region8: #{reverse.5} parent=4 // pred_region
        // Predicated region
        $region21: #{reverse.5} parent=8 // pred_check
          _
        $region22: #{reverse.5} parent=8 // pred_check_branch
          %53 = sbr.rel (0) target = $region24
        $region23: #{reverse.5} parent=8 // pred_region
          loop: start=0, step=1, limit=1
          $region25: #{reverse.5} parent=23 // loop_pre_header
            _
          $region26: #{reverse.5} parent=23 // loop_header
            %s55 = sphi 0, %s59
            %p56 = scmp.ge.s32.totalorder %s55, 1
            %s60 = sphi %s0, %s0
            %s61 = sphi [#allocation0], [#allocation0]
          $region27: #{reverse.5} parent=23 // loop_header_branch
            %58 = sbr.rel (%p56) target = $region31
          $region28: #{reverse.5} parent=23 // loop_body
            %v62 = vld [vmem:[%s60] sm:$0xff]
            %63 = vst [vmem:[%s61] sm:$0xff] %v62
            %v64 = vld [vmem:[%s60 + $0x8] sm:$0xff]
            %65 = vst [vmem:[%s61 + $0x8] sm:$0xff] %v64
            %v66 = vld [vmem:[%s60 + $0x10] sm:$0xff]
            %67 = vst [vmem:[%s61 + $0x10] sm:$0xff] %v66
            %v68 = vld [vmem:[%s60 + $0x18] sm:$0xff]
            %69 = vst [vmem:[%s61 + $0x18] sm:$0xff] %v68
            %v70 = vld [vmem:[%s60 + $0x20] sm:$0xff]
            %71 = vst [vmem:[%s61 + $0x20] sm:$0xff] %v70
            %v72 = vld [vmem:[%s60 + $0x28] sm:$0xff]
            %73 = vst [vmem:[%s61 + $0x28] sm:$0xff] %v72
            %v74 = vld [vmem:[%s60 + $0x30] sm:$0xff]
            %75 = vst [vmem:[%s61 + $0x30] sm:$0xff] %v74
            %v76 = vld [vmem:[%s60 + $0x38] sm:$0xff]
            %77 = vst [vmem:[%s61 + $0x38] sm:$0xff] %v76
            %v78 = vld [vmem:[%s60 + $0x40] sm:$0xff]
            %79 = vst [vmem:[%s61 + $0x40] sm:$0xff] %v78
            %v80 = vld [vmem:[%s60 + $0x48] sm:$0xff]
            %81 = vst [vmem:[%s61 + $0x48] sm:$0xff] %v80
            %v82 = vld [vmem:[%s60 + $0x50] sm:$0xff]
            %83 = vst [vmem:[%s61 + $0x50] sm:$0xff] %v82
            %v84 = vld [vmem:[%s60 + $0x58] sm:$0xff]
            %85 = vst [vmem:[%s61 + $0x58] sm:$0xff] %v84
            %v86 = vld [vmem:[%s60 + $0x60] sm:$0xff]
            %87 = vst [vmem:[%s61 + $0x60] sm:$0xff] %v86
            %v88 = vld [vmem:[%s60 + $0x68] sm:$0xff]
            %89 = vst [vmem:[%s61 + $0x68] sm:$0xff] %v88
            %v90 = vld [vmem:[%s60 + $0x70] sm:$0xff]
            %91 = vst [vmem:[%s61 + $0x70] sm:$0xff] %v90
            %v92 = vld [vmem:[%s60 + $0x78] sm:$0xff]
            %93 = vst [vmem:[%s61 + $0x78] sm:$0xff] %v92
          $region29: #{reverse.5} parent=23 // loop_footer
            %s59 = sadd.s32 1, %s55
          $region30: #{reverse.5} parent=23 // loop_footer_branch
            %54 = sbr.rel target = $region26
          $region31: #{reverse.5} parent=23 // loop_exit
            _
        $region24: #{reverse.5} parent=8 // pred_fallthru
          _
        // Predicated region
        $region32: #{reverse.5} parent=8 // pred_check
          _
        $region33: #{reverse.5} parent=8 // pred_check_branch
          %95 = sbr.rel target = $region35
        $region34: #{reverse.5} parent=8 // pred_region
          _
        $region35: #{reverse.5} parent=8 // pred_fallthru
          _
      $region9: #{reverse.5} parent=4 // pred_fallthru
        _
      // Predicated region
      $region10: #{reverse.5} parent=4 // pred_check
        _
      $region11: #{reverse.5} parent=4 // pred_check_branch
        %10 = sbr.rel target = $region13
      $region12: #{reverse.5} parent=4 // pred_region
        loop: start=0, step=1, limit=1
        $region14: #{reverse.5} parent=12 // loop_pre_header
          _
        $region15: #{reverse.5} parent=12 // loop_header
          %s13 = sphi 0, %s17
          %p14 = scmp.ge.s32.totalorder %s13, 1
          %s18 = sphi %s0, %s0
          %s19 = sphi [#allocation0], [#allocation0]
        $region16: #{reverse.5} parent=12 // loop_header_branch
          %16 = sbr.rel (%p14) target = $region20
        $region17: #{reverse.5} parent=12 // loop_body
          %v20 = vld [vmem:[%s18] sm:$0xff]
          %21 = vst [vmem:[%s19] sm:$0xff] %v20
          %v22 = vld [vmem:[%s18 + $0x8] sm:$0xff]
          %23 = vst [vmem:[%s19 + $0x8] sm:$0xff] %v22
          %v24 = vld [vmem:[%s18 + $0x10] sm:$0xff]
          %25 = vst [vmem:[%s19 + $0x10] sm:$0xff] %v24
          %v26 = vld [vmem:[%s18 + $0x18] sm:$0xff]
          %27 = vst [vmem:[%s19 + $0x18] sm:$0xff] %v26
          %v28 = vld [vmem:[%s18 + $0x20] sm:$0xff]
          %29 = vst [vmem:[%s19 + $0x20] sm:$0xff] %v28
          %v30 = vld [vmem:[%s18 + $0x28] sm:$0xff]
          %31 = vst [vmem:[%s19 + $0x28] sm:$0xff] %v30
          %v32 = vld [vmem:[%s18 + $0x30] sm:$0xff]
          %33 = vst [vmem:[%s19 + $0x30] sm:$0xff] %v32
          %v34 = vld [vmem:[%s18 + $0x38] sm:$0xff]
          %35 = vst [vmem:[%s19 + $0x38] sm:$0xff] %v34
          %v36 = vld [vmem:[%s18 + $0x40] sm:$0xff]
          %37 = vst [vmem:[%s19 + $0x40] sm:$0xff] %v36
          %v38 = vld [vmem:[%s18 + $0x48] sm:$0xff]
          %39 = vst [vmem:[%s19 + $0x48] sm:$0xff] %v38
          %v40 = vld [vmem:[%s18 + $0x50] sm:$0xff]
          %41 = vst [vmem:[%s19 + $0x50] sm:$0xff] %v40
          %v42 = vld [vmem:[%s18 + $0x58] sm:$0xff]
          %43 = vst [vmem:[%s19 + $0x58] sm:$0xff] %v42
          %v44 = vld [vmem:[%s18 + $0x60] sm:$0xff]
          %45 = vst [vmem:[%s19 + $0x60] sm:$0xff] %v44
          %v46 = vld [vmem:[%s18 + $0x68] sm:$0xff]
          %47 = vst [vmem:[%s19 + $0x68] sm:$0xff] %v46
          %v48 = vld [vmem:[%s18 + $0x70] sm:$0xff]
          %49 = vst [vmem:[%s19 + $0x70] sm:$0xff] %v48
          %v50 = vld [vmem:[%s18 + $0x78] sm:$0xff]
          %51 = vst [vmem:[%s19 + $0x78] sm:$0xff] %v50
        $region18: #{reverse.5} parent=12 // loop_footer
          %s17 = sadd.s32 1, %s13
        $region19: #{reverse.5} parent=12 // loop_footer_branch
          %12 = sbr.rel target = $region15
        $region20: #{reverse.5} parent=12 // loop_exit
          _
      $region13: #{reverse.5} parent=4 // pred_fallthru
        _
    $region5: #{reverse.5} parent=1 // pred_fallthru
      _
    %96 = vnop
    %v97 = vld [vmem:[#allocation0] sm:$0xff]
    %98 = vperm.xlu0 %4, %v97
    %v99 = vpop.permute.xlu0 %98
    %100 = vst [vmem:[#allocation1] sm:$0xff] %v99
    %s101 = scalar_lea.vmem [#allocation1], 8
    %s102 = scalar_lea.vmem [#allocation0], 8
    %v103 = vld [vmem:[%s102] sm:$0xff]
    %104 = vperm.xlu0 %4, %v103
    %v105 = vpop.permute.xlu0 %104
    %106 = vst [vmem:[%s101] sm:$0xff] %v105
    %s107 = scalar_lea.vmem [#allocation1], 16
    %s108 = scalar_lea.vmem [#allocation0], 16
    %v109 = vld [vmem:[%s108] sm:$0xff]
    %110 = vperm.xlu0 %4, %v109
    %v111 = vpop.permute.xlu0 %110
    %112 = vst [vmem:[%s107] sm:$0xff] %v111
    %s113 = scalar_lea.vmem %s107, 8 [#allocation1]
    %s114 = scalar_lea.vmem %s108, 8 [#allocation0]
    %v115 = vld [vmem:[%s114] sm:$0xff]
    %116 = vperm.xlu0 %4, %v115
    %v117 = vpop.permute.xlu0 %116
    %118 = vst [vmem:[%s113] sm:$0xff] %v117
    %s119 = scalar_lea.vmem [#allocation1], 32
    %s120 = scalar_lea.vmem [#allocation0], 32
    %v121 = vld [vmem:[%s120] sm:$0xff]
    %122 = vperm.xlu0 %4, %v121
    %v123 = vpop.permute.xlu0 %122
    %124 = vst [vmem:[%s119] sm:$0xff] %v123
    %s125 = scalar_lea.vmem %s119, 8 [#allocation1]
    %s126 = scalar_lea.vmem %s120, 8 [#allocation0]
    %v127 = vld [vmem:[%s126] sm:$0xff]
    %128 = vperm.xlu0 %4, %v127
    %v129 = vpop.permute.xlu0 %128
    %130 = vst [vmem:[%s125] sm:$0xff] %v129
    %s131 = scalar_lea.vmem [#allocation1], 48
    %s132 = scalar_lea.vmem [#allocation0], 48
    %v133 = vld [vmem:[%s132] sm:$0xff]
    %134 = vperm.xlu0 %4, %v133
    %v135 = vpop.permute.xlu0 %134
    %136 = vst [vmem:[%s131] sm:$0xff] %v135
    %s137 = scalar_lea.vmem %s131, 8 [#allocation1]
    %s138 = scalar_lea.vmem %s132, 8 [#allocation0]
    %v139 = vld [vmem:[%s138] sm:$0xff]
    %140 = vperm.xlu0 %4, %v139
    %v141 = vpop.permute.xlu0 %140
    %142 = vst [vmem:[%s137] sm:$0xff] %v141
    %s143 = scalar_lea.vmem [#allocation1], 64
    %s144 = scalar_lea.vmem [#allocation0], 64
    %v145 = vld [vmem:[%s144] sm:$0xff]
    %146 = vperm.xlu0 %4, %v145
    %v147 = vpop.permute.xlu0 %146
    %148 = vst [vmem:[%s143] sm:$0xff] %v147
    %s149 = scalar_lea.vmem %s143, 8 [#allocation1]
    %s150 = scalar_lea.vmem %s144, 8 [#allocation0]
    %v151 = vld [vmem:[%s150] sm:$0xff]
    %152 = vperm.xlu0 %4, %v151
    %v153 = vpop.permute.xlu0 %152
    %154 = vst [vmem:[%s149] sm:$0xff] %v153
    %s155 = scalar_lea.vmem [#allocation1], 80
    %s156 = scalar_lea.vmem [#allocation0], 80
    %v157 = vld [vmem:[%s156] sm:$0xff]
    %158 = vperm.xlu0 %4, %v157
    %v159 = vpop.permute.xlu0 %158
    %160 = vst [vmem:[%s155] sm:$0xff] %v159
    %s161 = scalar_lea.vmem %s155, 8 [#allocation1]
    %s162 = scalar_lea.vmem %s156, 8 [#allocation0]
    %v163 = vld [vmem:[%s162] sm:$0xff]
    %164 = vperm.xlu0 %4, %v163
    %v165 = vpop.permute.xlu0 %164
    %166 = vst [vmem:[%s161] sm:$0xff] %v165
    %s167 = scalar_lea.vmem [#allocation1], 96
    %s168 = scalar_lea.vmem [#allocation0], 96
    %v169 = vld [vmem:[%s168] sm:$0xff]
    %170 = vperm.xlu0 %4, %v169
    %v171 = vpop.permute.xlu0 %170
    %172 = vst [vmem:[%s167] sm:$0xff] %v171
    %s173 = scalar_lea.vmem %s167, 8 [#allocation1]
    %s174 = scalar_lea.vmem %s168, 8 [#allocation0]
    %v175 = vld [vmem:[%s174] sm:$0xff]
    %176 = vperm.xlu0 %4, %v175
    %v177 = vpop.permute.xlu0 %176
    %178 = vst [vmem:[%s173] sm:$0xff] %v177
    %s179 = scalar_lea.vmem [#allocation1], 112
    %s180 = scalar_lea.vmem [#allocation0], 112
    %v181 = vld [vmem:[%s180] sm:$0xff]
    %182 = vperm.xlu0 %4, %v181
    %v183 = vpop.permute.xlu0 %182
    %184 = vst [vmem:[%s179] sm:$0xff] %v183
    %s185 = scalar_lea.vmem %s179, 8 [#allocation1]
    %s186 = scalar_lea.vmem %s180, 8 [#allocation0]
    %v187 = vld [vmem:[%s186] sm:$0xff]
    %188 = vperm.xlu0 %4, %v187
    %v189 = vpop.permute.xlu0 %188
    %190 = vst [vmem:[%s185] sm:$0xff] %v189
    // Predicated region
    $region36: #{reverse.5} parent=1 // pred_check
      _
    $region37: #{reverse.5} parent=1 // pred_check_branch
      %192 = sbr.rel (0) target = $region39
    $region38: #{reverse.5} parent=1 // pred_region
      // Predicated region
      $region40: #{reverse.5} parent=38 // pred_check
        _
      $region41: #{reverse.5} parent=38 // pred_check_branch
        %194 = sbr.rel (0) target = $region43
      $region42: #{reverse.5} parent=38 // pred_region
        // Predicated region
        $region55: #{reverse.5} parent=42 // pred_check
          _
        $region56: #{reverse.5} parent=42 // pred_check_branch
          %239 = sbr.rel (0) target = $region58
        $region57: #{reverse.5} parent=42 // pred_region
          loop: start=0, step=1, limit=1
          $region59: #{reverse.5} parent=57 // loop_pre_header
            _
          $region60: #{reverse.5} parent=57 // loop_header
            %s241 = sphi 0, %s245
            %p242 = scmp.ge.s32.totalorder %s241, 1
            %s246 = sphi [#allocation1], [#allocation1]
            %s247 = sphi %s1, %s1
          $region61: #{reverse.5} parent=57 // loop_header_branch
            %244 = sbr.rel (%p242) target = $region65
          $region62: #{reverse.5} parent=57 // loop_body
            %v248 = vld [vmem:[%s246] sm:$0xff]
            %249 = vst [vmem:[%s247] sm:$0xff] %v248
            %v250 = vld [vmem:[%s246 + $0x8] sm:$0xff]
            %251 = vst [vmem:[%s247 + $0x8] sm:$0xff] %v250
            %v252 = vld [vmem:[%s246 + $0x10] sm:$0xff]
            %253 = vst [vmem:[%s247 + $0x10] sm:$0xff] %v252
            %v254 = vld [vmem:[%s246 + $0x18] sm:$0xff]
            %255 = vst [vmem:[%s247 + $0x18] sm:$0xff] %v254
            %v256 = vld [vmem:[%s246 + $0x20] sm:$0xff]
            %257 = vst [vmem:[%s247 + $0x20] sm:$0xff] %v256
            %v258 = vld [vmem:[%s246 + $0x28] sm:$0xff]
            %259 = vst [vmem:[%s247 + $0x28] sm:$0xff] %v258
            %v260 = vld [vmem:[%s246 + $0x30] sm:$0xff]
            %261 = vst [vmem:[%s247 + $0x30] sm:$0xff] %v260
            %v262 = vld [vmem:[%s246 + $0x38] sm:$0xff]
            %263 = vst [vmem:[%s247 + $0x38] sm:$0xff] %v262
            %v264 = vld [vmem:[%s246 + $0x40] sm:$0xff]
            %265 = vst [vmem:[%s247 + $0x40] sm:$0xff] %v264
            %v266 = vld [vmem:[%s246 + $0x48] sm:$0xff]
            %267 = vst [vmem:[%s247 + $0x48] sm:$0xff] %v266
            %v268 = vld [vmem:[%s246 + $0x50] sm:$0xff]
            %269 = vst [vmem:[%s247 + $0x50] sm:$0xff] %v268
            %v270 = vld [vmem:[%s246 + $0x58] sm:$0xff]
            %271 = vst [vmem:[%s247 + $0x58] sm:$0xff] %v270
            %v272 = vld [vmem:[%s246 + $0x60] sm:$0xff]
            %273 = vst [vmem:[%s247 + $0x60] sm:$0xff] %v272
            %v274 = vld [vmem:[%s246 + $0x68] sm:$0xff]
            %275 = vst [vmem:[%s247 + $0x68] sm:$0xff] %v274
            %v276 = vld [vmem:[%s246 + $0x70] sm:$0xff]
            %277 = vst [vmem:[%s247 + $0x70] sm:$0xff] %v276
            %v278 = vld [vmem:[%s246 + $0x78] sm:$0xff]
            %279 = vst [vmem:[%s247 + $0x78] sm:$0xff] %v278
          $region63: #{reverse.5} parent=57 // loop_footer
            %s245 = sadd.s32 1, %s241
          $region64: #{reverse.5} parent=57 // loop_footer_branch
            %240 = sbr.rel target = $region60
          $region65: #{reverse.5} parent=57 // loop_exit
            _
        $region58: #{reverse.5} parent=42 // pred_fallthru
          _
        // Predicated region
        $region66: #{reverse.5} parent=42 // pred_check
          _
        $region67: #{reverse.5} parent=42 // pred_check_branch
          %281 = sbr.rel target = $region69
        $region68: #{reverse.5} parent=42 // pred_region
          _
        $region69: #{reverse.5} parent=42 // pred_fallthru
          _
      $region43: #{reverse.5} parent=38 // pred_fallthru
        _
      // Predicated region
      $region44: #{reverse.5} parent=38 // pred_check
        _
      $region45: #{reverse.5} parent=38 // pred_check_branch
        %196 = sbr.rel target = $region47
      $region46: #{reverse.5} parent=38 // pred_region
        loop: start=0, step=1, limit=1
        $region48: #{reverse.5} parent=46 // loop_pre_header
          _
        $region49: #{reverse.5} parent=46 // loop_header
          %s199 = sphi 0, %s203
          %p200 = scmp.ge.s32.totalorder %s199, 1
          %s204 = sphi [#allocation1], [#allocation1]
          %s205 = sphi %s1, %s1
        $region50: #{reverse.5} parent=46 // loop_header_branch
          %202 = sbr.rel (%p200) target = $region54
        $region51: #{reverse.5} parent=46 // loop_body
          %v206 = vld [vmem:[%s204] sm:$0xff]
          %207 = vst [vmem:[%s205] sm:$0xff] %v206
          %v208 = vld [vmem:[%s204 + $0x8] sm:$0xff]
          %209 = vst [vmem:[%s205 + $0x8] sm:$0xff] %v208
          %v210 = vld [vmem:[%s204 + $0x10] sm:$0xff]
          %211 = vst [vmem:[%s205 + $0x10] sm:$0xff] %v210
          %v212 = vld [vmem:[%s204 + $0x18] sm:$0xff]
          %213 = vst [vmem:[%s205 + $0x18] sm:$0xff] %v212
          %v214 = vld [vmem:[%s204 + $0x20] sm:$0xff]
          %215 = vst [vmem:[%s205 + $0x20] sm:$0xff] %v214
          %v216 = vld [vmem:[%s204 + $0x28] sm:$0xff]
          %217 = vst [vmem:[%s205 + $0x28] sm:$0xff] %v216
          %v218 = vld [vmem:[%s204 + $0x30] sm:$0xff]
          %219 = vst [vmem:[%s205 + $0x30] sm:$0xff] %v218
          %v220 = vld [vmem:[%s204 + $0x38] sm:$0xff]
          %221 = vst [vmem:[%s205 + $0x38] sm:$0xff] %v220
          %v222 = vld [vmem:[%s204 + $0x40] sm:$0xff]
          %223 = vst [vmem:[%s205 + $0x40] sm:$0xff] %v222
          %v224 = vld [vmem:[%s204 + $0x48] sm:$0xff]
          %225 = vst [vmem:[%s205 + $0x48] sm:$0xff] %v224
          %v226 = vld [vmem:[%s204 + $0x50] sm:$0xff]
          %227 = vst [vmem:[%s205 + $0x50] sm:$0xff] %v226
          %v228 = vld [vmem:[%s204 + $0x58] sm:$0xff]
          %229 = vst [vmem:[%s205 + $0x58] sm:$0xff] %v228
          %v230 = vld [vmem:[%s204 + $0x60] sm:$0xff]
          %231 = vst [vmem:[%s205 + $0x60] sm:$0xff] %v230
          %v232 = vld [vmem:[%s204 + $0x68] sm:$0xff]
          %233 = vst [vmem:[%s205 + $0x68] sm:$0xff] %v232
          %v234 = vld [vmem:[%s204 + $0x70] sm:$0xff]
          %235 = vst [vmem:[%s205 + $0x70] sm:$0xff] %v234
          %v236 = vld [vmem:[%s204 + $0x78] sm:$0xff]
          %237 = vst [vmem:[%s205 + $0x78] sm:$0xff] %v236
        $region52: #{reverse.5} parent=46 // loop_footer
          %s203 = sadd.s32 1, %s199
        $region53: #{reverse.5} parent=46 // loop_footer_branch
          %198 = sbr.rel target = $region49
        $region54: #{reverse.5} parent=46 // loop_exit
          _
      $region47: #{reverse.5} parent=38 // pred_fallthru
        _
    $region39: #{reverse.5} parent=1 // pred_fallthru
      _
    %282 = vnop

// kernel: spectral_conv2d_forward.3
$region0: #{spectral_conv2d_forward.3}
  #allocation0 [shape = 'u32[]', space=smem, size = 0x4, offset = 0x4, fixed_abs, tag = 'smem constant byte address 0x4 - core index']
  #allocation1 [shape = 'u32[144,128]{1,0:T(1,128)}', space=vmem, size = 0x12000, scoped, tag = 'internal scratch']
  %s0 = inlined_call_operand.vmem [shape: f32[32,32], index: 0, kind: input, shape index: {}]
  %s1 = inlined_call_operand.vmem [shape: f32[4,8,8], index: 1, kind: input, shape index: {}]
  %s2 = inlined_call_operand.vmem [shape: f32[32,32], index: 2, kind: output, shape index: {}]
  %s3 = sld [smem:[#allocation0]]
  $region41: #{spectral_conv2d_forward.3} parent=0
    _
  %s5 = ssub.s32 1, %s3
  %s6 = scalar_select 0, %s5, %s3
  loop: start=0, step=1, limit=4
  $region2: #{spectral_conv2d_forward.3} parent=0 // loop_pre_header
    _
  $region3: #{spectral_conv2d_forward.3} parent=0 // loop_header
    %s8 = sphi 0, %s12
    %p9 = scmp.ge.s32.totalorder %s8, 4
    %s18 = sphi 0, %s20
    %s21 = sphi 0, %s18
    %s22 = sphi 0, %s21
    %s38 = sphi 0, %s22
    %s42 = sphi 0, %s42
    %s44 = sphi 0, %s42
    %s45 = sphi 0, %s44
    %s59 = sphi 0, %s45
    %s65 = sphi 0, %s67
    %s68 = sphi 0, %s65
    %s69 = sphi 0, %s68
    %s85 = sphi 0, %s69
  $region4: #{spectral_conv2d_forward.3} parent=0 // loop_header_branch
    %11 = sbr.rel (%p9) target = $region8
  $region5: #{spectral_conv2d_forward.3} parent=0 // loop_body
    %s13 = ssub.s32 %s8, 1
    %s14 = ssub.s32 %s8, 2
    %s15 = sadd.s32 %s8, 1
    %s16 = ssub.s32 %s8, %s15
    %p17 = scmp.eq.s32.totalorder %s16, 0
    %s19 = sadd.s32 %s18, 1
    %s20 = scalar_select %p17, %s18, %s19
    %p23 = pneg %p17
    %p24 = scmp.eq.s32.totalorder %s8, 1
    %p25 = por %p23, %p24
    %p26 = scmp.ne.s32.totalorder %s18, %s21
    %p27 = scmp.eq.s32.totalorder %s8, 0
    %p28 = por %p26, %p27
    %p29 = scmp.ne.s32.totalorder %s18, %s21
    %p30 = scmp.eq.s32.totalorder %s13, 1
    %p31 = por %p29, %p30
    %p32 = scmp.ne.s32.totalorder %s21, %s22
    %p33 = scmp.eq.s32.totalorder %s13, 0
    %p34 = por %p32, %p33
    %p35 = scmp.ne.s32.totalorder %s21, %s22
    %p36 = scmp.eq.s32.totalorder %s14, 1
    %p37 = por %p35, %p36
    %p39 = scmp.ne.s32.totalorder %s22, %s38
    %p40 = scmp.eq.s32.totalorder %s14, 0
    %p41 = por %p39, %p40
    %s43 = sadd.s32 %s42, 1
    %p46 = scmp.eq.s32.totalorder %s8, 1
    %p47 = scmp.ne.s32.totalorder %s42, %s44
    %p48 = scmp.eq.s32.totalorder %s8, 0
    %p49 = por %p47, %p48
    %p50 = scmp.ne.s32.totalorder %s42, %s44
    %p51 = scmp.eq.s32.totalorder %s13, 1
    %p52 = por %p50, %p51
    %p53 = scmp.ne.s32.totalorder %s44, %s45
    %p54 = scmp.eq.s32.totalorder %s13, 0
    %p55 = por %p53, %p54
    %p56 = scmp.ne.s32.totalorder %s44, %s45
    %p57 = scmp.eq.s32.totalorder %s14, 1
    %p58 = por %p56, %p57
    %p60 = scmp.ne.s32.totalorder %s45, %s59
    %p61 = scmp.eq.s32.totalorder %s14, 0
    %p62 = por %p60, %p61
    %s63 = ssub.s32 %s8, %s15
    %p64 = scmp.eq.s32.totalorder %s63, 0
    %s66 = sadd.s32 %s65, 1
    %s67 = scalar_select %p64, %s65, %s66
    %p70 = pneg %p64
    %p71 = scmp.eq.s32.totalorder %s8, 1
    %p72 = por %p70, %p71
    %p73 = scmp.ne.s32.totalorder %s65, %s68
    %p74 = scmp.eq.s32.totalorder %s8, 0
    %p75 = por %p73, %p74
    %p76 = scmp.ne.s32.totalorder %s65, %s68
    %p77 = scmp.eq.s32.totalorder %s13, 1
    %p78 = por %p76, %p77
    %p79 = scmp.ne.s32.totalorder %s68, %s69
    %p80 = scmp.eq.s32.totalorder %s13, 0
    %p81 = por %p79, %p80
    %p82 = scmp.ne.s32.totalorder %s68, %s69
    %p83 = scmp.eq.s32.totalorder %s14, 1
    %p84 = por %p82, %p83
    %p86 = scmp.ne.s32.totalorder %s69, %s85
    %p87 = scmp.eq.s32.totalorder %s14, 0
    %p88 = por %p86, %p87
    %p89 = scmp.le.s32.totalorder 1, %s8
    %p90 = scmp.lt.s32.totalorder %s8, 3
    %p91 = pnand %p89, %p90
    %p92 = pneg %p91
    // Predicated region
    $region9: #{spectral_conv2d_forward.3} parent=5 // pred_check
      _
    $region10: #{spectral_conv2d_forward.3} parent=5 // pred_check_branch
      %94 = sbr.rel (%p91) target = $region12
    $region11: #{spectral_conv2d_forward.3} parent=5 // pred_region
      %s95 = ssub.s32 %s8, 1
      // Predicated region
      $region13: #{spectral_conv2d_forward.3} parent=11 // pred_check
        %p96 = pneg %p55
      $region14: #{spectral_conv2d_forward.3} parent=11 // pred_check_branch
        %98 = sbr.rel (%p96) target = $region16
      $region15: #{spectral_conv2d_forward.3} parent=11 // pred_region
        _
      $region16: #{spectral_conv2d_forward.3} parent=11 // pred_fallthru
        _
    $region12: #{spectral_conv2d_forward.3} parent=5 // pred_fallthru
      _
    %p99 = scmp.lt.s32.totalorder %s8, 2
    // Predicated region
    $region17: #{spectral_conv2d_forward.3} parent=5 // pred_check
      %p100 = pneg %p99
    $region18: #{spectral_conv2d_forward.3} parent=5 // pred_check_branch
      %102 = sbr.rel (%p100) target = $region20
    $region19: #{spectral_conv2d_forward.3} parent=5 // pred_region
      // Predicated region
      $region21: #{spectral_conv2d_forward.3} parent=19 // pred_check
        %p103 = pneg %p28
      $region22: #{spectral_conv2d_forward.3} parent=19 // pred_check_branch
        %105 = sbr.rel (%p103) target = $region24
      $region23: #{spectral_conv2d_forward.3} parent=19 // pred_region
        %s106 = smul.u32 2, %s8
        %p107 = scmp.lt.s32.totalorder %s106, 3
        %s108 = scalar_select %p107, %s106, 3
        %s109 = smul.addr %s108, 8
        %s110 = scalar_lea.vmem %s0, %s109
        %s111 = smul.u32 2, %s8
      $region24: #{spectral_conv2d_forward.3} parent=19 // pred_fallthru
        _
    $region20: #{spectral_conv2d_forward.3} parent=5 // pred_fallthru
      _
    %p112 = scmp.le.s32.totalorder 1, %s8
    %p113 = scmp.lt.s32.totalorder %s8, 3
    %p114 = pnand %p112, %p113
    %p115 = pneg %p114
    // Predicated region
    $region25: #{spectral_conv2d_forward.3} parent=5 // pred_check
      _
    $region26: #{spectral_conv2d_forward.3} parent=5 // pred_check_branch
      %117 = sbr.rel (%p114) target = $region28
    $region27: #{spectral_conv2d_forward.3} parent=5 // pred_region
      %s118 = ssub.s32 %s8, 1
      %s119 = smul.u32 2, %s13
      %p120 = scmp.lt.s32.totalorder %s119, 3
      %s121 = scalar_select %p120, %s119, 3
      %s122 = smul.addr %s121, 8
      %s123 = scalar_lea.vmem %s0, %s122
      %p124 = pneg %p34
      %p125 = pneg %p31
      %p126 = pneg %p55
      %p127 = pneg %p52
      %p128 = pneg %p81
      %p129 = pneg %p78
      %s130 = smul.u32 2, %s13
      %p131 = scmp.lt.s32.totalorder %s130, 3
      %s132 = scalar_select %p131, %s130, 3
      %s133 = smul.addr %s132, 8
      %s134 = scalar_lea.vmem %s2, %s133
      %s135 = smul.u32 2, %s13
      %p136 = scmp.lt.s32.totalorder %s135, 3
      %s137 = scalar_select %p136, %s135, 3
      %s138 = smul.addr %s137, 8
      %s139 = scalar_lea.vmem %s0, %s138
      %s140 = smul.u32 2, %s13
      %s141 = smul.u32 2, %s13
      %p142 = scmp.lt.s32.totalorder %s141, 3
      %s143 = scalar_select %p142, %s141, 3
      %s144 = smul.addr %s143, 8
      %s145 = scalar_lea.vmem %s2, %s144
      %s146 = smul.u32 2, %s13
      %v147 = vld [vmem:[%s139] sm:$0xff]
      %v148 = vld [vmem:[%s139 + $0x8] sm:$0xff]
      %v149 = vld [vmem:[%s1] sm:$0xff]
      %vm150 = vcmask 64512
      %v152 = vsel %vm150, %v147, 0
      %v155 = vsel %vm150, %v148, 0
      %157 = vmatprep.subr.mxu0 0.0
      %158 = vmatpush1.msra.mxu0 %v149
      %159 = vmatprep.subr.mxu0 0.0
      %160 = vmatpush1.msra.mxu0 0.0
      %161 = vmatprep.subr.mxu0 0.0
      %162 = vmatpush1.msra.mxu0 0.0
      %163 = vmatprep.subr.mxu0 0.0
      %164 = vmatpush1.msra.mxu0 0.0
      %165 = vmatprep.subr.mxu0 0.0
      %166 = vmatpush1.msra.mxu0 0.0
      %167 = vmatprep.subr.mxu0 0.0
      %168 = vmatpush1.msra.mxu0 0.0
      %169 = vmatprep.subr.mxu0 0.0
      %170 = vmatpush1.msra.mxu0 0.0
      %171 = vmatprep.subr.mxu0 0.0
      %172 = vmatpush1.msra.mxu0 0.0
      %173 = vmatprep.subr.mxu0 0.0
      %174 = vmatpush1.msra.mxu0 0.0
      %175 = vmatprep.subr.mxu0 0.0
      %176 = vmatpush1.msra.mxu0 0.0
      %177 = vmatprep.subr.mxu0 0.0
      %178 = vmatpush1.msra.mxu0 0.0
      %179 = vmatprep.subr.mxu0 0.0
      %180 = vmatpush1.msra.mxu0 0.0
      %181 = vmatprep.subr.mxu0 0.0
      %182 = vmatpush1.msra.mxu0 0.0
      %183 = vmatprep.subr.mxu0 0.0
      %184 = vmatpush1.msra.mxu0 0.0
      %185 = vmatprep.subr.mxu0 0.0
      %186 = vmatpush1.msra.mxu0 0.0
      %187 = vmatprep.subr.mxu0 0.0
      %188 = vmatpush1.msra.mxu0 0.0
      %189 = vmatprep.subr.mxu0 0.0
      %190 = vmatpush1.msra.mxu0 0.0
      %191 = vmatprep.subr.mxu0 0.0
      %192 = vmatpush1.msra.mxu0 0.0
      %193 = vmatprep.subr.mxu0 0.0
      %194 = vmatpush1.msra.mxu0 0.0
      %195 = vmatprep.subr.mxu0 0.0
      %196 = vmatpush1.msra.mxu0 0.0
      %197 = vmatprep.subr.mxu0 0.0
      %198 = vmatpush1.msra.mxu0 0.0
      %199 = vmatprep.subr.mxu0 0.0
      %200 = vmatpush1.msra.mxu0 0.0
      %201 = vmatprep.subr.mxu0 0.0
      %202 = vmatpush1.msra.mxu0 0.0
      %203 = vmatprep.subr.mxu0 0.0
      %204 = vmatpush1.msra.mxu0 0.0
      %205 = vmatprep.subr.mxu0 0.0
      %206 = vmatpush1.msra.mxu0 0.0
      %207 = vmatprep.subr.mxu0 0.0
      %208 = vmatpush1.msra.mxu0 0.0
      %209 = vmatprep.subr.mxu0 0.0
      %210 = vmatpush1.msra.mxu0 0.0
      %211 = vmatprep.subr.mxu0 0.0
      %212 = vmatpush1.msra.mxu0 0.0
      %213 = vmatprep.subr.mxu0 0.0
      %214 = vmatpush1.msra.mxu0 0.0
      %215 = vmatprep.subr.mxu0 0.0
      %216 = vmatpush1.msra.mxu0 0.0
      %217 = vmatprep.subr.mxu0 0.0
      %218 = vmatpush1.msra.mxu0 0.0
      %219 = vmatprep.subr.mxu0 0.0
      %220 = vmatpush1.msra.mxu0 0.0
      %221 = vmatprep.mubr.f32.mxu0 0.0
      %222 = vmatmul.mubr.f32.gmra.mrb[0].mxu0 %v152
      %v223 = vpop.f32.mrb[0].mxu0
      %v224 = vadd.f32 0.0, %v223
      %v225 = vpop.f32.mrb[0].mxu0
      %226 = vmatprep.mubr.f32.mxu0 0.0
      %227 = vmatmul.mubr.f32.gmra.mrb[0].mxu0 %v155
      %v228 = vpop.f32.mrb[0].mxu0
      %v229 = vadd.f32 0.0, %v228
      %v230 = vpop.f32.mrb[0].mxu0
      %231 = vdwg.mxu0
      %s232 = scalar_lea.vmem %s1, 8
      %v233 = vld [vmem:[%s232] sm:$0xff]
      %234 = vrot.lane.b32.xlu0 %v147, 120
      %v235 = vpop.permute.xlu0 %234
      %236 = vrot.lane.b32.xlu0 %v148, 120
      %v237 = vpop.permute.xlu0 %236
      %v238 = vsel %vm150, %v235, 0
      %v240 = vsel %vm150, %v237, 0
      %242 = vmatprep.subr.mxu0 0.0
      %243 = vmatpush1.msra.mxu0 %v233
      %244 = vmatprep.subr.mxu0 0.0
      %245 = vmatpush1.msra.mxu0 0.0
      %246 = vmatprep.subr.mxu0 0.0
      %247 = vmatpush1.msra.mxu0 0.0
      %248 = vmatprep.subr.mxu0 0.0
      %249 = vmatpush1.msra.mxu0 0.0
      %250 = vmatprep.subr.mxu0 0.0
      %251 = vmatpush1.msra.mxu0 0.0
      %252 = vmatprep.subr.mxu0 0.0
      %253 = vmatpush1.msra.mxu0 0.0
      %254 = vmatprep.subr.mxu0 0.0
      %255 = vmatpush1.msra.mxu0 0.0
      %256 = vmatprep.subr.mxu0 0.0
      %257 = vmatpush1.msra.mxu0 0.0
      %258 = vmatprep.subr.mxu0 0.0
      %259 = vmatpush1.msra.mxu0 0.0
      %260 = vmatprep.subr.mxu0 0.0
      %261 = vmatpush1.msra.mxu0 0.0
      %262 = vmatprep.subr.mxu0 0.0
      %263 = vmatpush1.msra.mxu0 0.0
      %264 = vmatprep.subr.mxu0 0.0
      %265 = vmatpush1.msra.mxu0 0.0
      %266 = vmatprep.subr.mxu0 0.0
      %267 = vmatpush1.msra.mxu0 0.0
      %268 = vmatprep.subr.mxu0 0.0
      %269 = vmatpush1.msra.mxu0 0.0
      %270 = vmatprep.subr.mxu0 0.0
      %271 = vmatpush1.msra.mxu0 0.0
      %272 = vmatprep.subr.mxu0 0.0
      %273 = vmatpush1.msra.mxu0 0.0
      %274 = vmatprep.subr.mxu0 0.0
      %275 = vmatpush1.msra.mxu0 0.0
      %276 = vmatprep.subr.mxu0 0.0
      %277 = vmatpush1.msra.mxu0 0.0
      %278 = vmatprep.subr.mxu0 0.0
      %279 = vmatpush1.msra.mxu0 0.0
      %280 = vmatprep.subr.mxu0 0.0
      %281 = vmatpush1.msra.mxu0 0.0
      %282 = vmatprep.subr.mxu0 0.0
      %283 = vmatpush1.msra.mxu0 0.0
      %284 = vmatprep.subr.mxu0 0.0
      %285 = vmatpush1.msra.mxu0 0.0
      %286 = vmatprep.subr.mxu0 0.0
      %287 = vmatpush1.msra.mxu0 0.0
      %288 = vmatprep.subr.mxu0 0.0
      %289 = vmatpush1.msra.mxu0 0.0
      %290 = vmatprep.subr.mxu0 0.0
      %291 = vmatpush1.msra.mxu0 0.0
      %292 = vmatprep.subr.mxu0 0.0
      %293 = vmatpush1.msra.mxu0 0.0
      %294 = vmatprep.subr.mxu0 0.0
      %295 = vmatpush1.msra.mxu0 0.0
      %296 = vmatprep.subr.mxu0 0.0
      %297 = vmatpush1.msra.mxu0 0.0
      %298 = vmatprep.subr.mxu0 0.0
      %299 = vmatpush1.msra.mxu0 0.0
      %300 = vmatprep.subr.mxu0 0.0
      %301 = vmatpush1.msra.mxu0 0.0
      %302 = vmatprep.subr.mxu0 0.0
      %303 = vmatpush1.msra.mxu0 0.0
      %304 = vmatprep.subr.mxu0 0.0
      %305 = vmatpush1.msra.mxu0 0.0
      %306 = vmatprep.mubr.f32.mxu0 0.0
      %307 = vmatmul.mubr.f32.gmra.mrb[0].mxu0 %v238
      %v308 = vpop.f32.mrb[0].mxu0
      %v309 = vadd.f32 0.0, %v308
      %v310 = vpop.f32.mrb[0].mxu0
      %311 = vmatprep.mubr.f32.mxu0 0.0
      %312 = vmatmul.mubr.f32.gmra.mrb[0].mxu0 %v240
      %v313 = vpop.f32.mrb[0].mxu0
      %v314 = vadd.f32 0.0, %v313
      %v315 = vpop.f32.mrb[0].mxu0
      %316 = vdwg.mxu0
      %s317 = scalar_lea.vmem %s1, 16
      %v318 = vld [vmem:[%s317] sm:$0xff]
      %319 = vrot.lane.b32.xlu0 %v147, 112
      %v320 = vpop.permute.xlu0 %319
      %321 = vrot.lane.b32.xlu0 %v148, 112
      %v322 = vpop.permute.xlu0 %321
      %v323 = vsel %vm150, %v320, 0
      %v325 = vsel %vm150, %v322, 0
      %327 = vmatprep.subr.mxu0 0.0
      %328 = vmatpush1.msra.mxu0 %v318
      %329 = vmatprep.subr.mxu0 0.0
      %330 = vmatpush1.msra.mxu0 0.0
      %331 = vmatprep.subr.mxu0 0.0
      %332 = vmatpush1.msra.mxu0 0.0
      %333 = vmatprep.subr.mxu0 0.0
      %334 = vmatpush1.msra.mxu0 0.0
      %335 = vmatprep.subr.mxu0 0.0
      %336 = vmatpush1.msra.mxu0 0.0
      %337 = vmatprep.subr.mxu0 0.0
      %338 = vmatpush1.msra.mxu0 0.0
      %339 = vmatprep.subr.mxu0 0.0
      %340 = vmatpush1.msra.mxu0 0.0
      %341 = vmatprep.subr.mxu0 0.0
      %342 = vmatpush1.msra.mxu0 0.0
      %343 = vmatprep.subr.mxu0 0.0
      %344 = vmatpush1.msra.mxu0 0.0
      %345 = vmatprep.subr.mxu0 0.0
      %346 = vmatpush1.msra.mxu0 0.0
      %347 = vmatprep.subr.mxu0 0.0
      %348 = vmatpush1.msra.mxu0 0.0
      %349 = vmatprep.subr.mxu0 0.0
      %350 = vmatpush1.msra.mxu0 0.0
      %351 = vmatprep.subr.mxu0 0.0
      %352 = vmatpush1.msra.mxu0 0.0
      %353 = vmatprep.subr.mxu0 0.0
      %354 = vmatpush1.msra.mxu0 0.0
      %355 = vmatprep.subr.mxu0 0.0
      %356 = vmatpush1.msra.mxu0 0.0
      %357 = vmatprep.subr.mxu0 0.0
      %358 = vmatpush1.msra.mxu0 0.0
      %359 = vmatprep.subr.mxu0 0.0
      %360 = vmatpush1.msra.mxu0 0.0
      %361 = vmatprep.subr.mxu0 0.0
      %362 = vmatpush1.msra.mxu0 0.0
      %363 = vmatprep.subr.mxu0 0.0
      %364 = vmatpush1.msra.mxu0 0.0
      %365 = vmatprep.subr.mxu0 0.0
      %366 = vmatpush1.msra.mxu0 0.0
      %367 = vmatprep.subr.mxu0 0.0
      %368 = vmatpush1.msra.mxu0 0.0
      %369 = vmatprep.subr.mxu0 0.0
      %370 = vmatpush1.msra.mxu0 0.0
      %371 = vmatprep.subr.mxu0 0.0
      %372 = vmatpush1.msra.mxu0 0.0
      %373 = vmatprep.subr.mxu0 0.0
      %374 = vmatpush1.msra.mxu0 0.0
      %375 = vmatprep.subr.mxu0 0.0
      %376 = vmatpush1.msra.mxu0 0.0
      %377 = vmatprep.subr.mxu0 0.0
      %378 = vmatpush1.msra.mxu0 0.0
      %379 = vmatprep.subr.mxu0 0.0
      %380 = vmatpush1.msra.mxu0 0.0
      %381 = vmatprep.subr.mxu0 0.0
      %382 = vmatpush1.msra.mxu0 0.0
      %383 = vmatprep.subr.mxu0 0.0
      %384 = vmatpush1.msra.mxu0 0.0
      %385 = vmatprep.subr.mxu0 0.0
      %386 = vmatpush1.msra.mxu0 0.0
      %387 = vmatprep.subr.mxu0 0.0
      %388 = vmatpush1.msra.mxu0 0.0
      %389 = vmatprep.subr.mxu0 0.0
      %390 = vmatpush1.msra.mxu0 0.0
      %391 = vmatprep.mubr.f32.mxu0 0.0
      %392 = vmatmul.mubr.f32.gmra.mrb[0].mxu0 %v323
      %v393 = vpop.f32.mrb[0].mxu0
      %v394 = vadd.f32 0.0, %v393
      %v395 = vpop.f32.mrb[0].mxu0
      %396 = vmatprep.mubr.f32.mxu0 0.0
      %397 = vmatmul.mubr.f32.gmra.mrb[0].mxu0 %v325
      %v398 = vpop.f32.mrb[0].mxu0
      %v399 = vadd.f32 0.0, %v398
      %v400 = vpop.f32.mrb[0].mxu0
      %401 = vdwg.mxu0
      %s402 = scalar_lea.vmem %s1, 24
      %v403 = vld [vmem:[%s402] sm:$0xff]
      %404 = vrot.lane.b32.xlu0 %v147, 104
      %v405 = vpop.permute.xlu0 %404
      %406 = vrot.lane.b32.xlu0 %v148, 104
      %v407 = vpop.permute.xlu0 %406
      %v408 = vsel %vm150, %v405, 0
      %v410 = vsel %vm150, %v407, 0
      %412 = vmatprep.subr.mxu0 0.0
      %413 = vmatpush1.msra.mxu0 %v403
      %414 = vmatprep.subr.mxu0 0.0
      %415 = vmatpush1.msra.mxu0 0.0
      %416 = vmatprep.subr.mxu0 0.0
      %417 = vmatpush1.msra.mxu0 0.0
      %418 = vmatprep.subr.mxu0 0.0
      %419 = vmatpush1.msra.mxu0 0.0
      %420 = vmatprep.subr.mxu0 0.0
      %421 = vmatpush1.msra.mxu0 0.0
      %422 = vmatprep.subr.mxu0 0.0
      %423 = vmatpush1.msra.mxu0 0.0
      %424 = vmatprep.subr.mxu0 0.0
      %425 = vmatpush1.msra.mxu0 0.0
      %426 = vmatprep.subr.mxu0 0.0
      %427 = vmatpush1.msra.mxu0 0.0
      %428 = vmatprep.subr.mxu0 0.0
      %429 = vmatpush1.msra.mxu0 0.0
      %430 = vmatprep.subr.mxu0 0.0
      %431 = vmatpush1.msra.mxu0 0.0
      %432 = vmatprep.subr.mxu0 0.0
      %433 = vmatpush1.msra.mxu0 0.0
      %434 = vmatprep.subr.mxu0 0.0
      %435 = vmatpush1.msra.mxu0 0.0
      %436 = vmatprep.subr.mxu0 0.0
      %437 = vmatpush1.msra.mxu0 0.0
      %438 = vmatprep.subr.mxu0 0.0
      %439 = vmatpush1.msra.mxu0 0.0
      %440 = vmatprep.subr.mxu0 0.0
      %441 = vmatpush1.msra.mxu0 0.0
      %442 = vmatprep.subr.mxu0 0.0
      %443 = vmatpush1.msra.mxu0 0.0
      %444 = vmatprep.subr.mxu0 0.0
      %445 = vmatpush1.msra.mxu0 0.0
      %446 = vmatprep.subr.mxu0 0.0
      %447 = vmatpush1.msra.mxu0 0.0
      %448 = vmatprep.subr.mxu0 0.0
      %449 = vmatpush1.msra.mxu0 0.0
      %450 = vmatprep.subr.mxu0 0.0
      %451 = vmatpush1.msra.mxu0 0.0
      %452 = vmatprep.subr.mxu0 0.0
      %453 = vmatpush1.msra.mxu0 0.0
      %454 = vmatprep.subr.mxu0 0.0
      %455 = vmatpush1.msra.mxu0 0.0
      %456 = vmatprep.subr.mxu0 0.0
      %457 = vmatpush1.msra.mxu0 0.0
      %458 = vmatprep.subr.mxu0 0.0
      %459 = vmatpush1.msra.mxu0 0.0
      %460 = vmatprep.subr.mxu0 0.0
      %461 = vmatpush1.msra.mxu0 0.0
      %462 = vmatprep.subr.mxu0 0.0
      %463 = vmatpush1.msra.mxu0 0.0
      %464 = vmatprep.subr.mxu0 0.0
      %465 = vmatpush1.msra.mxu0 0.0
      %466 = vmatprep.subr.mxu0 0.0
      %467 = vmatpush1.msra.mxu0 0.0
      %468 = vmatprep.subr.mxu0 0.0
      %469 = vmatpush1.msra.mxu0 0.0
      %470 = vmatprep.subr.mxu0 0.0
      %471 = vmatpush1.msra.mxu0 0.0
      %472 = vmatprep.subr.mxu0 0.0
      %473 = vmatpush1.msra.mxu0 0.0
      %474 = vmatprep.subr.mxu0 0.0
      %475 = vmatpush1.msra.mxu0 0.0
      %476 = vmatprep.mubr.f32.mxu0 0.0
      %477 = vmatmul.mubr.f32.gmra.mrb[0].mxu0 %v408
      %v478 = vpop.f32.mrb[0].mxu0
      %v479 = vadd.f32 0.0, %v478
      %v480 = vpop.f32.mrb[0].mxu0
      %481 = vmatprep.mubr.f32.mxu0 0.0
      %482 = vmatmul.mubr.f32.gmra.mrb[0].mxu0 %v410
      %v483 = vpop.f32.mrb[0].mxu0
      %v484 = vadd.f32 0.0, %v483
      %v485 = vpop.f32.mrb[0].mxu0
      %486 = vdwg.mxu0
      %489 = vrot.lane.b32.xlu0 %v309, 8
      %v490 = vpop.permute.xlu0 %489
      %491 = vrot.lane.b32.xlu0 %v314, 8
      %v492 = vpop.permute.xlu0 %491
      %497 = vrot.lane.b32.xlu0 %v394, 16
      %v498 = vpop.permute.xlu0 %497
      %499 = vrot.lane.b32.xlu0 %v399, 16
      %v500 = vpop.permute.xlu0 %499
      %505 = vrot.lane.b32.xlu0 %v479, 24
      %v506 = vpop.permute.xlu0 %505
      %507 = vrot.lane.b32.xlu0 %v484, 24
      %v508 = vpop.permute.xlu0 %507
      %v511 = vsel %vm150, %v224, %v490
      %v512 = vsel %vm150, %v229, %v492
      %vm513 = vcmask 130048
      %v514 = vsel %vm513, %v511, %v498
      %v515 = vsel %vm513, %v512, %v500
      %vm516 = vcmask 195584
      %v517 = vsel %vm516, %v514, %v506
      %v518 = vsel %vm516, %v515, %v508
      %vm519 = vcmask 261120
      %520 = vst.msk [vmem:[%s145] sm:$0xff] %vm519, %v517
      %521 = vst.msk [vmem:[%s145 + $0x8] sm:$0xff] %vm519, %v518
      %s522 = smul.u32 2, %s13
      %p523 = scmp.lt.s32.totalorder %s522, 3
      %s524 = scalar_select %p523, %s522, 3
      %s525 = smul.addr %s524, 8
      %s526 = scalar_lea.vmem %s2, %s525
      // Predicated region
      $region29: #{spectral_conv2d_forward.3} parent=27 // pred_check
        %p527 = pneg %p78
      $region30: #{spectral_conv2d_forward.3} parent=27 // pred_check_branch
        %529 = sbr.rel (%p527) target = $region32
      $region31: #{spectral_conv2d_forward.3} parent=27 // pred_region
        %s530 = smul.u32 2, %s13
      $region32: #{spectral_conv2d_forward.3} parent=27 // pred_fallthru
        _
    $region28: #{spectral_conv2d_forward.3} parent=5 // pred_fallthru
      _
    %p531 = scmp.le.s32.totalorder 2, %s8
    // Predicated region
    $region33: #{spectral_conv2d_forward.3} parent=5 // pred_check
      %p532 = pneg %p531
    $region34: #{spectral_conv2d_forward.3} parent=5 // pred_check_branch
      %534 = sbr.rel (%p532) target = $region36
    $region35: #{spectral_conv2d_forward.3} parent=5 // pred_region
      %s535 = ssub.s32 %s8, 2
      // Predicated region
      $region37: #{spectral_conv2d_forward.3} parent=35 // pred_check
        %p536 = pneg %p84
      $region38: #{spectral_conv2d_forward.3} parent=35 // pred_check_branch
        %538 = sbr.rel (%p536) target = $region40
      $region39: #{spectral_conv2d_forward.3} parent=35 // pred_region
        %s539 = smul.u32 2, %s14
        %p540 = scmp.lt.s32.totalorder %s539, 3
        %s541 = scalar_select %p540, %s539, 3
        %s542 = smul.addr %s541, 8
        %s543 = scalar_lea.vmem %s2, %s542
      $region40: #{spectral_conv2d_forward.3} parent=35 // pred_fallthru
        _
    $region36: #{spectral_conv2d_forward.3} parent=5 // pred_fallthru
      _
  $region6: #{spectral_conv2d_forward.3} parent=0 // loop_footer
    %s12 = sadd.s32 1, %s8
  $region7: #{spectral_conv2d_forward.3} parent=0 // loop_footer_branch
    %7 = sbr.rel target = $region3
  $region8: #{spectral_conv2d_forward.3} parent=0 // loop_exit
    _

// kernel: spectral_conv2d_forward.5
$region0: #{spectral_conv2d_forward.5}
  #allocation0 [shape = 'u32[]', space=smem, size = 0x4, offset = 0x4, fixed_abs, tag = 'smem constant byte address 0x4 - core index']
  #allocation1 [shape = 'u32[144,128]{1,0:T(1,128)}', space=vmem, size = 0x12000, scoped, tag = 'internal scratch']
  %s0 = inlined_call_operand.vmem [shape: f32[512,4], index: 0, kind: input, shape index: {}]
  %s1 = inlined_call_operand.vmem [shape: f32[4,16], index: 1, kind: input, shape index: {}]
  %s2 = inlined_call_operand.vmem [shape: f32[1,16], index: 2, kind: input, shape index: {}]
  %s3 = inlined_call_operand.vmem [shape: f32[16,4], index: 3, kind: input, shape index: {}]
  %s4 = inlined_call_operand.vmem [shape: f32[1,4], index: 4, kind: input, shape index: {}]
  %s5 = inlined_call_operand.vmem [shape: f32[512,4], index: 5, kind: output, shape index: {}]
  %s6 = sld [smem:[#allocation0]]
  $region53: #{spectral_conv2d_forward.5} parent=0
    _
  %s8 = ssub.s32 1, %s6
  %s9 = scalar_select 0, %s8, %s6
  loop: start=0, step=1, limit=4
  $region2: #{spectral_conv2d_forward.5} parent=0 // loop_pre_header
    _
  $region3: #{spectral_conv2d_forward.5} parent=0 // loop_header
    %s11 = sphi 0, %s15
    %p12 = scmp.ge.s32.totalorder %s11, 4
    %s21 = sphi 0, %s23
    %s24 = sphi 0, %s21
    %s25 = sphi 0, %s24
    %s41 = sphi 0, %s25
    %s45 = sphi 0, %s45
    %s47 = sphi 0, %s45
    %s48 = sphi 0, %s47
    %s62 = sphi 0, %s48
    %s66 = sphi 0, %s66
    %s68 = sphi 0, %s66
    %s69 = sphi 0, %s68
    %s83 = sphi 0, %s69
    %s87 = sphi 0, %s87
    %s89 = sphi 0, %s87
    %s90 = sphi 0, %s89
    %s104 = sphi 0, %s90
    %s108 = sphi 0, %s108
    %s110 = sphi 0, %s108
    %s111 = sphi 0, %s110
    %s125 = sphi 0, %s111
    %s131 = sphi 0, %s133
    %s134 = sphi 0, %s131
    %s135 = sphi 0, %s134
    %s151 = sphi 0, %s135
  $region4: #{spectral_conv2d_forward.5} parent=0 // loop_header_branch
    %14 = sbr.rel (%p12) target = $region8
  $region5: #{spectral_conv2d_forward.5} parent=0 // loop_body
    %s16 = ssub.s32 %s11, 1
    %s17 = ssub.s32 %s11, 2
    %s18 = sadd.s32 %s11, 1
    %s19 = ssub.s32 %s11, %s18
    %p20 = scmp.eq.s32.totalorder %s19, 0
    %s22 = sadd.s32 %s21, 1
    %s23 = scalar_select %p20, %s21, %s22
    %p26 = pneg %p20
    %p27 = scmp.eq.s32.totalorder %s11, 1
    %p28 = por %p26, %p27
    %p29 = scmp.ne.s32.totalorder %s21, %s24
    %p30 = scmp.eq.s32.totalorder %s11, 0
    %p31 = por %p29, %p30
    %p32 = scmp.ne.s32.totalorder %s21, %s24
    %p33 = scmp.eq.s32.totalorder %s16, 1
    %p34 = por %p32, %p33
    %p35 = scmp.ne.s32.totalorder %s24, %s25
    %p36 = scmp.eq.s32.totalorder %s16, 0
    %p37 = por %p35, %p36
    %p38 = scmp.ne.s32.totalorder %s24, %s25
    %p39 = scmp.eq.s32.totalorder %s17, 1
    %p40 = por %p38, %p39
    %p42 = scmp.ne.s32.totalorder %s25, %s41
    %p43 = scmp.eq.s32.totalorder %s17, 0
    %p44 = por %p42, %p43
    %s46 = sadd.s32 %s45, 1
    %p49 = scmp.eq.s32.totalorder %s11, 1
    %p50 = scmp.ne.s32.totalorder %s45, %s47
    %p51 = scmp.eq.s32.totalorder %s11, 0
    %p52 = por %p50, %p51
    %p53 = scmp.ne.s32.totalorder %s45, %s47
    %p54 = scmp.eq.s32.totalorder %s16, 1
    %p55 = por %p53, %p54
    %p56 = scmp.ne.s32.totalorder %s47, %s48
    %p57 = scmp.eq.s32.totalorder %s16, 0
    %p58 = por %p56, %p57
    %p59 = scmp.ne.s32.totalorder %s47, %s48
    %p60 = scmp.eq.s32.totalorder %s17, 1
    %p61 = por %p59, %p60
    %p63 = scmp.ne.s32.totalorder %s48, %s62
    %p64 = scmp.eq.s32.totalorder %s17, 0
    %p65 = por %p63, %p64
    %s67 = sadd.s32 %s66, 1
    %p70 = scmp.eq.s32.totalorder %s11, 1
    %p71 = scmp.ne.s32.totalorder %s66, %s68
    %p72 = scmp.eq.s32.totalorder %s11, 0
    %p73 = por %p71, %p72
    %p74 = scmp.ne.s32.totalorder %s66, %s68
    %p75 = scmp.eq.s32.totalorder %s16, 1
    %p76 = por %p74, %p75
    %p77 = scmp.ne.s32.totalorder %s68, %s69
    %p78 = scmp.eq.s32.totalorder %s16, 0
    %p79 = por %p77, %p78
    %p80 = scmp.ne.s32.totalorder %s68, %s69
    %p81 = scmp.eq.s32.totalorder %s17, 1
    %p82 = por %p80, %p81
    %p84 = scmp.ne.s32.totalorder %s69, %s83
    %p85 = scmp.eq.s32.totalorder %s17, 0
    %p86 = por %p84, %p85
    %s88 = sadd.s32 %s87, 1
    %p91 = scmp.eq.s32.totalorder %s11, 1
    %p92 = scmp.ne.s32.totalorder %s87, %s89
    %p93 = scmp.eq.s32.totalorder %s11, 0
    %p94 = por %p92, %p93
    %p95 = scmp.ne.s32.totalorder %s87, %s89
    %p96 = scmp.eq.s32.totalorder %s16, 1
    %p97 = por %p95, %p96
    %p98 = scmp.ne.s32.totalorder %s89, %s90
    %p99 = scmp.eq.s32.totalorder %s16, 0
    %p100 = por %p98, %p99
    %p101 = scmp.ne.s32.totalorder %s89, %s90
    %p102 = scmp.eq.s32.totalorder %s17, 1
    %p103 = por %p101, %p102
    %p105 = scmp.ne.s32.totalorder %s90, %s104
    %p106 = scmp.eq.s32.totalorder %s17, 0
    %p107 = por %p105, %p106
    %s109 = sadd.s32 %s108, 1
    %p112 = scmp.eq.s32.totalorder %s11, 1
    %p113 = scmp.ne.s32.totalorder %s108, %s110
    %p114 = scmp.eq.s32.totalorder %s11, 0
    %p115 = por %p113, %p114
    %p116 = scmp.ne.s32.totalorder %s108, %s110
    %p117 = scmp.eq.s32.totalorder %s16, 1
    %p118 = por %p116, %p117
    %p119 = scmp.ne.s32.totalorder %s110, %s111
    %p120 = scmp.eq.s32.totalorder %s16, 0
    %p121 = por %p119, %p120
    %p122 = scmp.ne.s32.totalorder %s110, %s111
    %p123 = scmp.eq.s32.totalorder %s17, 1
    %p124 = por %p122, %p123
    %p126 = scmp.ne.s32.totalorder %s111, %s125
    %p127 = scmp.eq.s32.totalorder %s17, 0
    %p128 = por %p126, %p127
    %s129 = ssub.s32 %s11, %s18
    %p130 = scmp.eq.s32.totalorder %s129, 0
    %s132 = sadd.s32 %s131, 1
    %s133 = scalar_select %p130, %s131, %s132
    %p136 = pneg %p130
    %p137 = scmp.eq.s32.totalorder %s11, 1
    %p138 = por %p136, %p137
    %p139 = scmp.ne.s32.totalorder %s131, %s134
    %p140 = scmp.eq.s32.totalorder %s11, 0
    %p141 = por %p139, %p140
    %p142 = scmp.ne.s32.totalorder %s131, %s134
    %p143 = scmp.eq.s32.totalorder %s16, 1
    %p144 = por %p142, %p143
    %p145 = scmp.ne.s32.totalorder %s134, %s135
    %p146 = scmp.eq.s32.totalorder %s16, 0
    %p147 = por %p145, %p146
    %p148 = scmp.ne.s32.totalorder %s134, %s135
    %p149 = scmp.eq.s32.totalorder %s17, 1
    %p150 = por %p148, %p149
    %p152 = scmp.ne.s32.totalorder %s135, %s151
    %p153 = scmp.eq.s32.totalorder %s17, 0
    %p154 = por %p152, %p153
    %p155 = scmp.le.s32.totalorder 1, %s11
    %p156 = scmp.lt.s32.totalorder %s11, 3
    %p157 = pnand %p155, %p156
    %p158 = pneg %p157
    // Predicated region
    $region9: #{spectral_conv2d_forward.5} parent=5 // pred_check
      _
    $region10: #{spectral_conv2d_forward.5} parent=5 // pred_check_branch
      %160 = sbr.rel (%p157) target = $region12
    $region11: #{spectral_conv2d_forward.5} parent=5 // pred_region
      %s161 = ssub.s32 %s11, 1
      // Predicated region
      $region13: #{spectral_conv2d_forward.5} parent=11 // pred_check
        %p162 = pneg %p58
      $region14: #{spectral_conv2d_forward.5} parent=11 // pred_check_branch
        %164 = sbr.rel (%p162) target = $region16
      $region15: #{spectral_conv2d_forward.5} parent=11 // pred_region
        _
      $region16: #{spectral_conv2d_forward.5} parent=11 // pred_fallthru
        _
      // Predicated region
      $region17: #{spectral_conv2d_forward.5} parent=11 // pred_check
        %p165 = pneg %p79
      $region18: #{spectral_conv2d_forward.5} parent=11 // pred_check_branch
        %167 = sbr.rel (%p165) target = $region20
      $region19: #{spectral_conv2d_forward.5} parent=11 // pred_region
        _
      $region20: #{spectral_conv2d_forward.5} parent=11 // pred_fallthru
        _
      // Predicated region
      $region21: #{spectral_conv2d_forward.5} parent=11 // pred_check
        %p168 = pneg %p100
      $region22: #{spectral_conv2d_forward.5} parent=11 // pred_check_branch
        %170 = sbr.rel (%p168) target = $region24
      $region23: #{spectral_conv2d_forward.5} parent=11 // pred_region
        _
      $region24: #{spectral_conv2d_forward.5} parent=11 // pred_fallthru
        _
      // Predicated region
      $region25: #{spectral_conv2d_forward.5} parent=11 // pred_check
        %p171 = pneg %p121
      $region26: #{spectral_conv2d_forward.5} parent=11 // pred_check_branch
        %173 = sbr.rel (%p171) target = $region28
      $region27: #{spectral_conv2d_forward.5} parent=11 // pred_region
        _
      $region28: #{spectral_conv2d_forward.5} parent=11 // pred_fallthru
        _
    $region12: #{spectral_conv2d_forward.5} parent=5 // pred_fallthru
      _
    %p174 = scmp.lt.s32.totalorder %s11, 2
    // Predicated region
    $region29: #{spectral_conv2d_forward.5} parent=5 // pred_check
      %p175 = pneg %p174
    $region30: #{spectral_conv2d_forward.5} parent=5 // pred_check_branch
      %177 = sbr.rel (%p175) target = $region32
    $region31: #{spectral_conv2d_forward.5} parent=5 // pred_region
      // Predicated region
      $region33: #{spectral_conv2d_forward.5} parent=31 // pred_check
        %p178 = pneg %p31
      $region34: #{spectral_conv2d_forward.5} parent=31 // pred_check_branch
        %180 = sbr.rel (%p178) target = $region36
      $region35: #{spectral_conv2d_forward.5} parent=31 // pred_region
        %s181 = smul.u32 32, %s11
        %p182 = scmp.lt.s32.totalorder %s181, 63
        %s183 = scalar_select %p182, %s181, 63
        %s184 = smul.addr %s183, 8
        %s185 = scalar_lea.vmem %s0, %s184
        %s186 = smul.u32 32, %s11
      $region36: #{spectral_conv2d_forward.5} parent=31 // pred_fallthru
        _
    $region32: #{spectral_conv2d_forward.5} parent=5 // pred_fallthru
      _
    %p187 = scmp.le.s32.totalorder 1, %s11
    %p188 = scmp.lt.s32.totalorder %s11, 3
    %p189 = pnand %p187, %p188
    %p190 = pneg %p189
    // Predicated region
    $region37: #{spectral_conv2d_forward.5} parent=5 // pred_check
      _
    $region38: #{spectral_conv2d_forward.5} parent=5 // pred_check_branch
      %192 = sbr.rel (%p189) target = $region40
    $region39: #{spectral_conv2d_forward.5} parent=5 // pred_region
      %s193 = ssub.s32 %s11, 1
      %s194 = smul.u32 32, %s16
      %p195 = scmp.lt.s32.totalorder %s194, 63
      %s196 = scalar_select %p195, %s194, 63
      %s197 = smul.addr %s196, 8
      %s198 = scalar_lea.vmem %s0, %s197
      %p199 = pneg %p37
      %p200 = pneg %p34
      %p201 = pneg %p58
      %p202 = pneg %p55
      %p203 = pneg %p79
      %p204 = pneg %p76
      %p205 = pneg %p100
      %p206 = pneg %p97
      %p207 = pneg %p121
      %p208 = pneg %p118
      %p209 = pneg %p147
      %p210 = pneg %p144
      %s211 = smul.u32 32, %s16
      %p212 = scmp.lt.s32.totalorder %s211, 63
      %s213 = scalar_select %p212, %s211, 63
      %s214 = smul.addr %s213, 8
      %s215 = scalar_lea.vmem %s5, %s214
      %s216 = smul.u32 32, %s16
      %p217 = scmp.lt.s32.totalorder %s216, 63
      %s218 = scalar_select %p217, %s216, 63
      %s219 = smul.addr %s218, 8
      %s220 = scalar_lea.vmem %s0, %s219
      %s221 = smul.u32 32, %s16
      %s222 = smul.u32 32, %s16
      %p223 = scmp.lt.s32.totalorder %s222, 63
      %s224 = scalar_select %p223, %s222, 63
      %s225 = smul.addr %s224, 8
      %s226 = scalar_lea.vmem %s5, %s225
      %s227 = smul.u32 32, %s16
      %v228 = vld [vmem:[%s220] sm:$0xff]
      %v229 = vld [vmem:[%s220 + $0x8] sm:$0xff]
      %v230 = vld [vmem:[%s220 + $0x10] sm:$0xff]
      %v231 = vld [vmem:[%s220 + $0x18] sm:$0xff]
      %v232 = vld [vmem:[%s220 + $0x20] sm:$0xff]
      %v233 = vld [vmem:[%s220 + $0x28] sm:$0xff]
      %v234 = vld [vmem:[%s220 + $0x30] sm:$0xff]
      %v235 = vld [vmem:[%s220 + $0x38] sm:$0xff]
      %v236 = vld [vmem:[%s220 + $0x40] sm:$0xff]
      %v237 = vld [vmem:[%s220 + $0x48] sm:$0xff]
      %v238 = vld [vmem:[%s220 + $0x50] sm:$0xff]
      %v239 = vld [vmem:[%s220 + $0x58] sm:$0xff]
      %v240 = vld [vmem:[%s220 + $0x60] sm:$0xff]
      %v241 = vld [vmem:[%s220 + $0x68] sm:$0xff]
      %v242 = vld [vmem:[%s220 + $0x70] sm:$0xff]
      %v243 = vld [vmem:[%s220 + $0x78] sm:$0xff]
      %v244 = vld [vmem:[%s220 + $0x80] sm:$0xff]
      %v245 = vld [vmem:[%s220 + $0x88] sm:$0xff]
      %v246 = vld [vmem:[%s220 + $0x90] sm:$0xff]
      %v247 = vld [vmem:[%s220 + $0x98] sm:$0xff]
      %v248 = vld [vmem:[%s220 + $0xa0] sm:$0xff]
      %v249 = vld [vmem:[%s220 + $0xa8] sm:$0xff]
      %v250 = vld [vmem:[%s220 + $0xb0] sm:$0xff]
      %v251 = vld [vmem:[%s220 + $0xb8] sm:$0xff]
      %v252 = vld [vmem:[%s220 + $0xc0] sm:$0xff]
      %v253 = vld [vmem:[%s220 + $0xc8] sm:$0xff]
      %v254 = vld [vmem:[%s220 + $0xd0] sm:$0xff]
      %v255 = vld [vmem:[%s220 + $0xd8] sm:$0xff]
      %v256 = vld [vmem:[%s220 + $0xe0] sm:$0xff]
      %v257 = vld [vmem:[%s220 + $0xe8] sm:$0xff]
      %v258 = vld [vmem:[%s220 + $0xf0] sm:$0xff]
      %v259 = vld [vmem:[%s220 + $0xf8] sm:$0xff]
      %v260 = vld [vmem:[%s1] sm:$0xf]
      %v261 = vld [vmem:[%s2] sm:$0x1]
      %v263 = vlaneseq
      %v264 = vshrl.u32 %v263, 7
      %v265 = vsub.s32 0, %v264
      %v266 = vrot.slane %v261, %v265
      %vm268 = vcmask 31744
      %v270 = vsel %vm268, %v228, 0
      %v273 = vsel %vm268, %v229, 0
      %v276 = vsel %vm268, %v230, 0
      %v279 = vsel %vm268, %v231, 0
      %v282 = vsel %vm268, %v232, 0
      %v285 = vsel %vm268, %v233, 0
      %v288 = vsel %vm268, %v234, 0
      %v291 = vsel %vm268, %v235, 0
      %v294 = vsel %vm268, %v236, 0
      %v297 = vsel %vm268, %v237, 0
      %v300 = vsel %vm268, %v238, 0
      %v303 = vsel %vm268, %v239, 0
      %v306 = vsel %vm268, %v240, 0
      %v309 = vsel %vm268, %v241, 0
      %v312 = vsel %vm268, %v242, 0
      %v315 = vsel %vm268, %v243, 0
      %v318 = vsel %vm268, %v244, 0
      %v321 = vsel %vm268, %v245, 0
      %v324 = vsel %vm268, %v246, 0
      %v327 = vsel %vm268, %v247, 0
      %v330 = vsel %vm268, %v248, 0
      %v333 = vsel %vm268, %v249, 0
      %v336 = vsel %vm268, %v250, 0
      %v339 = vsel %vm268, %v251, 0
      %v342 = vsel %vm268, %v252, 0
      %v345 = vsel %vm268, %v253, 0
      %v348 = vsel %vm268, %v254, 0
      %v351 = vsel %vm268, %v255, 0
      %v354 = vsel %vm268, %v256, 0
      %v357 = vsel %vm268, %v257, 0
      %v360 = vsel %vm268, %v258, 0
      %v363 = vsel %vm268, %v259, 0
      %vm365 = vcmask 1043456
      %v367 = vsel %vm365, %v260, 0
      %369 = vmatprep.subr.mxu0 0.0
      %370 = vmatpush1.msra.mxu0 %v367
      %371 = vmatprep.subr.mxu0 0.0
      %372 = vmatpush1.msra.mxu0 0.0
      %373 = vmatprep.subr.mxu0 0.0
      %374 = vmatpush1.msra.mxu0 0.0
      %375 = vmatprep.subr.mxu0 0.0
      %376 = vmatpush1.msra.mxu0 0.0
      %377 = vmatprep.subr.mxu0 0.0
      %378 = vmatpush1.msra.mxu0 0.0
      %379 = vmatprep.subr.mxu0 0.0
      %380 = vmatpush1.msra.mxu0 0.0
      %381 = vmatprep.subr.mxu0 0.0
      %382 = vmatpush1.msra.mxu0 0.0
      %383 = vmatprep.subr.mxu0 0.0
      %384 = vmatpush1.msra.mxu0 0.0
      %385 = vmatprep.subr.mxu0 0.0
      %386 = vmatpush1.msra.mxu0 0.0
      %387 = vmatprep.subr.mxu0 0.0
      %388 = vmatpush1.msra.mxu0 0.0
      %389 = vmatprep.subr.mxu0 0.0
      %390 = vmatpush1.msra.mxu0 0.0
      %391 = vmatprep.subr.mxu0 0.0
      %392 = vmatpush1.msra.mxu0 0.0
      %393 = vmatprep.subr.mxu0 0.0
      %394 = vmatpush1.msra.mxu0 0.0
      %395 = vmatprep.subr.mxu0 0.0
      %396 = vmatpush1.msra.mxu0 0.0
      %397 = vmatprep.subr.mxu0 0.0
      %398 = vmatpush1.msra.mxu0 0.0
      %399 = vmatprep.subr.mxu0 0.0
      %400 = vmatpush1.msra.mxu0 0.0
      %401 = vmatprep.subr.mxu0 0.0
      %402 = vmatpush1.msra.mxu0 0.0
      %403 = vmatprep.subr.mxu0 0.0
      %404 = vmatpush1.msra.mxu0 0.0
      %405 = vmatprep.subr.mxu0 0.0
      %406 = vmatpush1.msra.mxu0 0.0
      %407 = vmatprep.subr.mxu0 0.0
      %408 = vmatpush1.msra.mxu0 0.0
      %409 = vmatprep.subr.mxu0 0.0
      %410 = vmatpush1.msra.mxu0 0.0
      %411 = vmatprep.subr.mxu0 0.0
      %412 = vmatpush1.msra.mxu0 0.0
      %413 = vmatprep.subr.mxu0 0.0
      %414 = vmatpush1.msra.mxu0 0.0
      %415 = vmatprep.subr.mxu0 0.0
      %416 = vmatpush1.msra.mxu0 0.0
      %417 = vmatprep.subr.mxu0 0.0
      %418 = vmatpush1.msra.mxu0 0.0
      %419 = vmatprep.subr.mxu0 0.0
      %420 = vmatpush1.msra.mxu0 0.0
      %421 = vmatprep.subr.mxu0 0.0
      %422 = vmatpush1.msra.mxu0 0.0
      %423 = vmatprep.subr.mxu0 0.0
      %424 = vmatpush1.msra.mxu0 0.0
      %425 = vmatprep.subr.mxu0 0.0
      %426 = vmatpush1.msra.mxu0 0.0
      %427 = vmatprep.subr.mxu0 0.0
      %428 = vmatpush1.msra.mxu0 0.0
      %429 = vmatprep.subr.mxu0 0.0
      %430 = vmatpush1.msra.mxu0 0.0
      %431 = vmatprep.subr.mxu0 0.0
      %432 = vmatpush1.msra.mxu0 0.0
      %433 = vmatprep.mubr.f32.mxu0 0.0
      %434 = vmatmul.mubr.f32.gmra.mrb[0].mxu0 %v270
      %v435 = vpop.f32.mrb[0].mxu0
      %v436 = vadd.f32 %v266, %v435
      %v437 = vpop.f32.mrb[0].mxu0
      %438 = vmatprep.mubr.f32.mxu0 0.0
      %439 = vmatmul.mubr.f32.gmra.mrb[0].mxu0 %v273
      %v440 = vpop.f32.mrb[0].mxu0
      %v441 = vadd.f32 %v266, %v440
      %v442 = vpop.f32.mrb[0].mxu0
      %443 = vmatprep.mubr.f32.mxu0 0.0
      %444 = vmatmul.mubr.f32.gmra.mrb[0].mxu0 %v276
      %v445 = vpop.f32.mrb[0].mxu0
      %v446 = vadd.f32 %v266, %v445
      %v447 = vpop.f32.mrb[0].mxu0
      %448 = vmatprep.mubr.f32.mxu0 0.0
      %449 = vmatmul.mubr.f32.gmra.mrb[0].mxu0 %v279
      %v450 = vpop.f32.mrb[0].mxu0
      %v451 = vadd.f32 %v266, %v450
      %v452 = vpop.f32.mrb[0].mxu0
      %453 = vmatprep.mubr.f32.mxu0 0.0
      %454 = vmatmul.mubr.f32.gmra.mrb[0].mxu0 %v282
      %v455 = vpop.f32.mrb[0].mxu0
      %v456 = vadd.f32 %v266, %v455
      %v457 = vpop.f32.mrb[0].mxu0
      %458 = vmatprep.mubr.f32.mxu0 0.0
      %459 = vmatmul.mubr.f32.gmra.mrb[0].mxu0 %v285
      %v460 = vpop.f32.mrb[0].mxu0
      %v461 = vadd.f32 %v266, %v460
      %v462 = vpop.f32.mrb[0].mxu0
      %463 = vmatprep.mubr.f32.mxu0 0.0
      %464 = vmatmul.mubr.f32.gmra.mrb[0].mxu0 %v288
      %v465 = vpop.f32.mrb[0].mxu0
      %v466 = vadd.f32 %v266, %v465
      %v467 = vpop.f32.mrb[0].mxu0
      %468 = vmatprep.mubr.f32.mxu0 0.0
      %469 = vmatmul.mubr.f32.gmra.mrb[0].mxu0 %v291
      %v470 = vpop.f32.mrb[0].mxu0
      %v471 = vadd.f32 %v266, %v470
      %v472 = vpop.f32.mrb[0].mxu0
      %473 = vmatprep.mubr.f32.mxu0 0.0
      %474 = vmatmul.mubr.f32.gmra.mrb[0].mxu0 %v294
      %v475 = vpop.f32.mrb[0].mxu0
      %v476 = vadd.f32 %v266, %v475
      %v477 = vpop.f32.mrb[0].mxu0
      %478 = vmatprep.mubr.f32.mxu0 0.0
      %479 = vmatmul.mubr.f32.gmra.mrb[0].mxu0 %v297
      %v480 = vpop.f32.mrb[0].mxu0
      %v481 = vadd.f32 %v266, %v480
      %v482 = vpop.f32.mrb[0].mxu0
      %483 = vmatprep.mubr.f32.mxu0 0.0
      %484 = vmatmul.mubr.f32.gmra.mrb[0].mxu0 %v300
      %v485 = vpop.f32.mrb[0].mxu0
      %v486 = vadd.f32 %v266, %v485
      %v487 = vpop.f32.mrb[0].mxu0
      %488 = vmatprep.mubr.f32.mxu0 0.0
      %489 = vmatmul.mubr.f32.gmra.mrb[0].mxu0 %v303
      %v490 = vpop.f32.mrb[0].mxu0
      %v491 = vadd.f32 %v266, %v490
      %v492 = vpop.f32.mrb[0].mxu0
      %493 = vmatprep.mubr.f32.mxu0 0.0
      %494 = vmatmul.mubr.f32.gmra.mrb[0].mxu0 %v306
      %v495 = vpop.f32.mrb[0].mxu0
      %v496 = vadd.f32 %v266, %v495
      %v497 = vpop.f32.mrb[0].mxu0
      %498 = vmatprep.mubr.f32.mxu0 0.0
      %499 = vmatmul.mubr.f32.gmra.mrb[0].mxu0 %v309
      %v500 = vpop.f32.mrb[0].mxu0
      %v501 = vadd.f32 %v266, %v500
      %v502 = vpop.f32.mrb[0].mxu0
      %503 = vmatprep.mubr.f32.mxu0 0.0
      %504 = vmatmul.mubr.f32.gmra.mrb[0].mxu0 %v312
      %v505 = vpop.f32.mrb[0].mxu0
      %v506 = vadd.f32 %v266, %v505
      %v507 = vpop.f32.mrb[0].mxu0
      %508 = vmatprep.mubr.f32.mxu0 0.0
      %509 = vmatmul.mubr.f32.gmra.mrb[0].mxu0 %v315
      %v510 = vpop.f32.mrb[0].mxu0
      %v511 = vadd.f32 %v266, %v510
      %v512 = vpop.f32.mrb[0].mxu0
      %513 = vmatprep.mubr.f32.mxu0 0.0
      %514 = vmatmul.mubr.f32.gmra.mrb[0].mxu0 %v318
      %v515 = vpop.f32.mrb[0].mxu0
      %v516 = vadd.f32 %v266, %v515
      %v517 = vpop.f32.mrb[0].mxu0
      %518 = vmatprep.mubr.f32.mxu0 0.0
      %519 = vmatmul.mubr.f32.gmra.mrb[0].mxu0 %v321
      %v520 = vpop.f32.mrb[0].mxu0
      %v521 = vadd.f32 %v266, %v520
      %v522 = vpop.f32.mrb[0].mxu0
      %523 = vmatprep.mubr.f32.mxu0 0.0
      %524 = vmatmul.mubr.f32.gmra.mrb[0].mxu0 %v324
      %v525 = vpop.f32.mrb[0].mxu0
      %v526 = vadd.f32 %v266, %v525
      %v527 = vpop.f32.mrb[0].mxu0
      %528 = vmatprep.mubr.f32.mxu0 0.0
      %529 = vmatmul.mubr.f32.gmra.mrb[0].mxu0 %v327
      %v530 = vpop.f32.mrb[0].mxu0
      %v531 = vadd.f32 %v266, %v530
      %v532 = vpop.f32.mrb[0].mxu0
      %533 = vmatprep.mubr.f32.mxu0 0.0
      %534 = vmatmul.mubr.f32.gmra.mrb[0].mxu0 %v330
      %v535 = vpop.f32.mrb[0].mxu0
      %v536 = vadd.f32 %v266, %v535
      %v537 = vpop.f32.mrb[0].mxu0
      %538 = vmatprep.mubr.f32.mxu0 0.0
      %539 = vmatmul.mubr.f32.gmra.mrb[0].mxu0 %v333
      %v540 = vpop.f32.mrb[0].mxu0
      %v541 = vadd.f32 %v266, %v540
      %v542 = vpop.f32.mrb[0].mxu0
      %543 = vmatprep.mubr.f32.mxu0 0.0
      %544 = vmatmul.mubr.f32.gmra.mrb[0].mxu0 %v336
      %v545 = vpop.f32.mrb[0].mxu0
      %v546 = vadd.f32 %v266, %v545
      %v547 = vpop.f32.mrb[0].mxu0
      %548 = vmatprep.mubr.f32.mxu0 0.0
      %549 = vmatmul.mubr.f32.gmra.mrb[0].mxu0 %v339
      %v550 = vpop.f32.mrb[0].mxu0
      %v551 = vadd.f32 %v266, %v550
      %v552 = vpop.f32.mrb[0].mxu0
      %553 = vmatprep.mubr.f32.mxu0 0.0
      %554 = vmatmul.mubr.f32.gmra.mrb[0].mxu0 %v342
      %v555 = vpop.f32.mrb[0].mxu0
      %v556 = vadd.f32 %v266, %v555
      %v557 = vpop.f32.mrb[0].mxu0
      %558 = vmatprep.mubr.f32.mxu0 0.0
      %559 = vmatmul.mubr.f32.gmra.mrb[0].mxu0 %v345
      %v560 = vpop.f32.mrb[0].mxu0
      %v561 = vadd.f32 %v266, %v560
      %v562 = vpop.f32.mrb[0].mxu0
      %563 = vmatprep.mubr.f32.mxu0 0.0
      %564 = vmatmul.mubr.f32.gmra.mrb[0].mxu0 %v348
      %v565 = vpop.f32.mrb[0].mxu0
      %v566 = vadd.f32 %v266, %v565
      %v567 = vpop.f32.mrb[0].mxu0
      %568 = vmatprep.mubr.f32.mxu0 0.0
      %569 = vmatmul.mubr.f32.gmra.mrb[0].mxu0 %v351
      %v570 = vpop.f32.mrb[0].mxu0
      %v571 = vadd.f32 %v266, %v570
      %v572 = vpop.f32.mrb[0].mxu0
      %573 = vmatprep.mubr.f32.mxu0 0.0
      %574 = vmatmul.mubr.f32.gmra.mrb[0].mxu0 %v354
      %v575 = vpop.f32.mrb[0].mxu0
      %v576 = vadd.f32 %v266, %v575
      %v577 = vpop.f32.mrb[0].mxu0
      %578 = vmatprep.mubr.f32.mxu0 0.0
      %579 = vmatmul.mubr.f32.gmra.mrb[0].mxu0 %v357
      %v580 = vpop.f32.mrb[0].mxu0
      %v581 = vadd.f32 %v266, %v580
      %v582 = vpop.f32.mrb[0].mxu0
      %583 = vmatprep.mubr.f32.mxu0 0.0
      %584 = vmatmul.mubr.f32.gmra.mrb[0].mxu0 %v360
      %v585 = vpop.f32.mrb[0].mxu0
      %v586 = vadd.f32 %v266, %v585
      %v587 = vpop.f32.mrb[0].mxu0
      %588 = vmatprep.mubr.f32.mxu0 0.0
      %589 = vmatmul.mubr.f32.gmra.mrb[0].mxu0 %v363
      %v590 = vpop.f32.mrb[0].mxu0
      %v591 = vadd.f32 %v266, %v590
      %v592 = vpop.f32.mrb[0].mxu0
      %593 = vdwg.mxu0
      %v594 = vmax.f32 %v436, 0.0
      %v595 = vmax.f32 %v441, 0.0
      %v596 = vmax.f32 %v446, 0.0
      %v597 = vmax.f32 %v451, 0.0
      %v598 = vmax.f32 %v456, 0.0
      %v599 = vmax.f32 %v461, 0.0
      %v600 = vmax.f32 %v466, 0.0
      %v601 = vmax.f32 %v471, 0.0
      %v602 = vmax.f32 %v476, 0.0
      %v603 = vmax.f32 %v481, 0.0
      %v604 = vmax.f32 %v486, 0.0
      %v605 = vmax.f32 %v491, 0.0
      %v606 = vmax.f32 %v496, 0.0
      %v607 = vmax.f32 %v501, 0.0
      %v608 = vmax.f32 %v506, 0.0
      %v609 = vmax.f32 %v511, 0.0
      %v610 = vmax.f32 %v516, 0.0
      %v611 = vmax.f32 %v521, 0.0
      %v612 = vmax.f32 %v526, 0.0
      %v613 = vmax.f32 %v531, 0.0
      %v614 = vmax.f32 %v536, 0.0
      %v615 = vmax.f32 %v541, 0.0
      %v616 = vmax.f32 %v546, 0.0
      %v617 = vmax.f32 %v551, 0.0
      %v618 = vmax.f32 %v556, 0.0
      %v619 = vmax.f32 %v561, 0.0
      %v620 = vmax.f32 %v566, 0.0
      %v621 = vmax.f32 %v571, 0.0
      %v622 = vmax.f32 %v576, 0.0
      %v623 = vmax.f32 %v581, 0.0
      %v624 = vmax.f32 %v586, 0.0
      %v625 = vmax.f32 %v591, 0.0
      %v626 = vld [vmem:[%s3] sm:$0xff]
      %v627 = vld [vmem:[%s3 + $0x8] sm:$0xff]
      %v628 = vld [vmem:[%s4] sm:$0x1]
      %v630 = vlaneseq
      %v631 = vshrl.u32 %v630, 7
      %v632 = vsub.s32 0, %v631
      %v633 = vrot.slane %v628, %v632
      %vm635 = vcmask 130048
      %v637 = vsel %vm635, %v594, 0
      %v640 = vsel %vm635, %v595, 0
      %v643 = vsel %vm635, %v596, 0
      %v646 = vsel %vm635, %v597, 0
      %v649 = vsel %vm635, %v598, 0
      %v652 = vsel %vm635, %v599, 0
      %v655 = vsel %vm635, %v600, 0
      %v658 = vsel %vm635, %v601, 0
      %v661 = vsel %vm635, %v602, 0
      %v664 = vsel %vm635, %v603, 0
      %v667 = vsel %vm635, %v604, 0
      %v670 = vsel %vm635, %v605, 0
      %v673 = vsel %vm635, %v606, 0
      %v676 = vsel %vm635, %v607, 0
      %v679 = vsel %vm635, %v608, 0
      %v682 = vsel %vm635, %v609, 0
      %v685 = vsel %vm635, %v610, 0
      %v688 = vsel %vm635, %v611, 0
      %v691 = vsel %vm635, %v612, 0
      %v694 = vsel %vm635, %v613, 0
      %v697 = vsel %vm635, %v614, 0
      %v700 = vsel %vm635, %v615, 0
      %v703 = vsel %vm635, %v616, 0
      %v706 = vsel %vm635, %v617, 0
      %v709 = vsel %vm635, %v618, 0
      %v712 = vsel %vm635, %v619, 0
      %v715 = vsel %vm635, %v620, 0
      %v718 = vsel %vm635, %v621, 0
      %v721 = vsel %vm635, %v622, 0
      %v724 = vsel %vm635, %v623, 0
      %v727 = vsel %vm635, %v624, 0
      %v730 = vsel %vm635, %v625, 0
      %732 = vmatprep.subr.mxu0 0.0
      %733 = vmatpush1.msra.mxu0 %v626
      %734 = vmatprep.subr.mxu0 0.0
      %735 = vmatpush1.msra.mxu0 %v627
      %736 = vmatprep.subr.mxu0 0.0
      %737 = vmatpush1.msra.mxu0 0.0
      %738 = vmatprep.subr.mxu0 0.0
      %739 = vmatpush1.msra.mxu0 0.0
      %740 = vmatprep.subr.mxu0 0.0
      %741 = vmatpush1.msra.mxu0 0.0
      %742 = vmatprep.subr.mxu0 0.0
      %743 = vmatpush1.msra.mxu0 0.0
      %744 = vmatprep.subr.mxu0 0.0
      %745 = vmatpush1.msra.mxu0 0.0
      %746 = vmatprep.subr.mxu0 0.0
      %747 = vmatpush1.msra.mxu0 0.0
      %748 = vmatprep.subr.mxu0 0.0
      %749 = vmatpush1.msra.mxu0 0.0
      %750 = vmatprep.subr.mxu0 0.0
      %751 = vmatpush1.msra.mxu0 0.0
      %752 = vmatprep.subr.mxu0 0.0
      %753 = vmatpush1.msra.mxu0 0.0
      %754 = vmatprep.subr.mxu0 0.0
      %755 = vmatpush1.msra.mxu0 0.0
      %756 = vmatprep.subr.mxu0 0.0
      %757 = vmatpush1.msra.mxu0 0.0
      %758 = vmatprep.subr.mxu0 0.0
      %759 = vmatpush1.msra.mxu0 0.0
      %760 = vmatprep.subr.mxu0 0.0
      %761 = vmatpush1.msra.mxu0 0.0
      %762 = vmatprep.subr.mxu0 0.0
      %763 = vmatpush1.msra.mxu0 0.0
      %764 = vmatprep.subr.mxu0 0.0
      %765 = vmatpush1.msra.mxu0 0.0
      %766 = vmatprep.subr.mxu0 0.0
      %767 = vmatpush1.msra.mxu0 0.0
      %768 = vmatprep.subr.mxu0 0.0
      %769 = vmatpush1.msra.mxu0 0.0
      %770 = vmatprep.subr.mxu0 0.0
      %771 = vmatpush1.msra.mxu0 0.0
      %772 = vmatprep.subr.mxu0 0.0
      %773 = vmatpush1.msra.mxu0 0.0
      %774 = vmatprep.subr.mxu0 0.0
      %775 = vmatpush1.msra.mxu0 0.0
      %776 = vmatprep.subr.mxu0 0.0
      %777 = vmatpush1.msra.mxu0 0.0
      %778 = vmatprep.subr.mxu0 0.0
      %779 = vmatpush1.msra.mxu0 0.0
      %780 = vmatprep.subr.mxu0 0.0
      %781 = vmatpush1.msra.mxu0 0.0
      %782 = vmatprep.subr.mxu0 0.0
      %783 = vmatpush1.msra.mxu0 0.0
      %784 = vmatprep.subr.mxu0 0.0
      %785 = vmatpush1.msra.mxu0 0.0
      %786 = vmatprep.subr.mxu0 0.0
      %787 = vmatpush1.msra.mxu0 0.0
      %788 = vmatprep.subr.mxu0 0.0
      %789 = vmatpush1.msra.mxu0 0.0
      %790 = vmatprep.subr.mxu0 0.0
      %791 = vmatpush1.msra.mxu0 0.0
      %792 = vmatprep.subr.mxu0 0.0
      %793 = vmatpush1.msra.mxu0 0.0
      %794 = vmatprep.subr.mxu0 0.0
      %795 = vmatpush1.msra.mxu0 0.0
      %796 = vmatprep.mubr.f32.mxu0 0.0
      %797 = vmatmul.mubr.f32.gmra.mrb[0].mxu0 %v637
      %v798 = vpop.f32.mrb[0].mxu0
      %v799 = vadd.f32 %v633, %v798
      %v800 = vpop.f32.mrb[0].mxu0
      %801 = vmatprep.mubr.f32.mxu0 0.0
      %802 = vmatmul.mubr.f32.gmra.mrb[0].mxu0 %v640
      %v803 = vpop.f32.mrb[0].mxu0
      %v804 = vadd.f32 %v633, %v803
      %v805 = vpop.f32.mrb[0].mxu0
      %806 = vmatprep.mubr.f32.mxu0 0.0
      %807 = vmatmul.mubr.f32.gmra.mrb[0].mxu0 %v643
      %v808 = vpop.f32.mrb[0].mxu0
      %v809 = vadd.f32 %v633, %v808
      %v810 = vpop.f32.mrb[0].mxu0
      %811 = vmatprep.mubr.f32.mxu0 0.0
      %812 = vmatmul.mubr.f32.gmra.mrb[0].mxu0 %v646
      %v813 = vpop.f32.mrb[0].mxu0
      %v814 = vadd.f32 %v633, %v813
      %v815 = vpop.f32.mrb[0].mxu0
      %816 = vmatprep.mubr.f32.mxu0 0.0
      %817 = vmatmul.mubr.f32.gmra.mrb[0].mxu0 %v649
      %v818 = vpop.f32.mrb[0].mxu0
      %v819 = vadd.f32 %v633, %v818
      %v820 = vpop.f32.mrb[0].mxu0
      %821 = vmatprep.mubr.f32.mxu0 0.0
      %822 = vmatmul.mubr.f32.gmra.mrb[0].mxu0 %v652
      %v823 = vpop.f32.mrb[0].mxu0
      %v824 = vadd.f32 %v633, %v823
      %v825 = vpop.f32.mrb[0].mxu0
      %826 = vmatprep.mubr.f32.mxu0 0.0
      %827 = vmatmul.mubr.f32.gmra.mrb[0].mxu0 %v655
      %v828 = vpop.f32.mrb[0].mxu0
      %v829 = vadd.f32 %v633, %v828
      %v830 = vpop.f32.mrb[0].mxu0
      %831 = vmatprep.mubr.f32.mxu0 0.0
      %832 = vmatmul.mubr.f32.gmra.mrb[0].mxu0 %v658
      %v833 = vpop.f32.mrb[0].mxu0
      %v834 = vadd.f32 %v633, %v833
      %v835 = vpop.f32.mrb[0].mxu0
      %836 = vmatprep.mubr.f32.mxu0 0.0
      %837 = vmatmul.mubr.f32.gmra.mrb[0].mxu0 %v661
      %v838 = vpop.f32.mrb[0].mxu0
      %v839 = vadd.f32 %v633, %v838
      %v840 = vpop.f32.mrb[0].mxu0
      %841 = vmatprep.mubr.f32.mxu0 0.0
      %842 = vmatmul.mubr.f32.gmra.mrb[0].mxu0 %v664
      %v843 = vpop.f32.mrb[0].mxu0
      %v844 = vadd.f32 %v633, %v843
      %v845 = vpop.f32.mrb[0].mxu0
      %846 = vmatprep.mubr.f32.mxu0 0.0
      %847 = vmatmul.mubr.f32.gmra.mrb[0].mxu0 %v667
      %v848 = vpop.f32.mrb[0].mxu0
      %v849 = vadd.f32 %v633, %v848
      %v850 = vpop.f32.mrb[0].mxu0
      %851 = vmatprep.mubr.f32.mxu0 0.0
      %852 = vmatmul.mubr.f32.gmra.mrb[0].mxu0 %v670
      %v853 = vpop.f32.mrb[0].mxu0
      %v854 = vadd.f32 %v633, %v853
      %v855 = vpop.f32.mrb[0].mxu0
      %856 = vmatprep.mubr.f32.mxu0 0.0
      %857 = vmatmul.mubr.f32.gmra.mrb[0].mxu0 %v673
      %v858 = vpop.f32.mrb[0].mxu0
      %v859 = vadd.f32 %v633, %v858
      %v860 = vpop.f32.mrb[0].mxu0
      %861 = vmatprep.mubr.f32.mxu0 0.0
      %862 = vmatmul.mubr.f32.gmra.mrb[0].mxu0 %v676
      %v863 = vpop.f32.mrb[0].mxu0
      %v864 = vadd.f32 %v633, %v863
      %v865 = vpop.f32.mrb[0].mxu0
      %866 = vmatprep.mubr.f32.mxu0 0.0
      %867 = vmatmul.mubr.f32.gmra.mrb[0].mxu0 %v679
      %v868 = vpop.f32.mrb[0].mxu0
      %v869 = vadd.f32 %v633, %v868
      %v870 = vpop.f32.mrb[0].mxu0
      %871 = vmatprep.mubr.f32.mxu0 0.0
      %872 = vmatmul.mubr.f32.gmra.mrb[0].mxu0 %v682
      %v873 = vpop.f32.mrb[0].mxu0
      %v874 = vadd.f32 %v633, %v873
      %v875 = vpop.f32.mrb[0].mxu0
      %876 = vmatprep.mubr.f32.mxu0 0.0
      %877 = vmatmul.mubr.f32.gmra.mrb[0].mxu0 %v685
      %v878 = vpop.f32.mrb[0].mxu0
      %v879 = vadd.f32 %v633, %v878
      %v880 = vpop.f32.mrb[0].mxu0
      %881 = vmatprep.mubr.f32.mxu0 0.0
      %882 = vmatmul.mubr.f32.gmra.mrb[0].mxu0 %v688
      %v883 = vpop.f32.mrb[0].mxu0
      %v884 = vadd.f32 %v633, %v883
      %v885 = vpop.f32.mrb[0].mxu0
      %886 = vmatprep.mubr.f32.mxu0 0.0
      %887 = vmatmul.mubr.f32.gmra.mrb[0].mxu0 %v691
      %v888 = vpop.f32.mrb[0].mxu0
      %v889 = vadd.f32 %v633, %v888
      %v890 = vpop.f32.mrb[0].mxu0
      %891 = vmatprep.mubr.f32.mxu0 0.0
      %892 = vmatmul.mubr.f32.gmra.mrb[0].mxu0 %v694
      %v893 = vpop.f32.mrb[0].mxu0
      %v894 = vadd.f32 %v633, %v893
      %v895 = vpop.f32.mrb[0].mxu0
      %896 = vmatprep.mubr.f32.mxu0 0.0
      %897 = vmatmul.mubr.f32.gmra.mrb[0].mxu0 %v697
      %v898 = vpop.f32.mrb[0].mxu0
      %v899 = vadd.f32 %v633, %v898
      %v900 = vpop.f32.mrb[0].mxu0
      %901 = vmatprep.mubr.f32.mxu0 0.0
      %902 = vmatmul.mubr.f32.gmra.mrb[0].mxu0 %v700
      %v903 = vpop.f32.mrb[0].mxu0
      %v904 = vadd.f32 %v633, %v903
      %v905 = vpop.f32.mrb[0].mxu0
      %906 = vmatprep.mubr.f32.mxu0 0.0
      %907 = vmatmul.mubr.f32.gmra.mrb[0].mxu0 %v703
      %v908 = vpop.f32.mrb[0].mxu0
      %v909 = vadd.f32 %v633, %v908
      %v910 = vpop.f32.mrb[0].mxu0
      %911 = vmatprep.mubr.f32.mxu0 0.0
      %912 = vmatmul.mubr.f32.gmra.mrb[0].mxu0 %v706
      %v913 = vpop.f32.mrb[0].mxu0
      %v914 = vadd.f32 %v633, %v913
      %v915 = vpop.f32.mrb[0].mxu0
      %916 = vmatprep.mubr.f32.mxu0 0.0
      %917 = vmatmul.mubr.f32.gmra.mrb[0].mxu0 %v709
      %v918 = vpop.f32.mrb[0].mxu0
      %v919 = vadd.f32 %v633, %v918
      %v920 = vpop.f32.mrb[0].mxu0
      %921 = vmatprep.mubr.f32.mxu0 0.0
      %922 = vmatmul.mubr.f32.gmra.mrb[0].mxu0 %v712
      %v923 = vpop.f32.mrb[0].mxu0
      %v924 = vadd.f32 %v633, %v923
      %v925 = vpop.f32.mrb[0].mxu0
      %926 = vmatprep.mubr.f32.mxu0 0.0
      %927 = vmatmul.mubr.f32.gmra.mrb[0].mxu0 %v715
      %v928 = vpop.f32.mrb[0].mxu0
      %v929 = vadd.f32 %v633, %v928
      %v930 = vpop.f32.mrb[0].mxu0
      %931 = vmatprep.mubr.f32.mxu0 0.0
      %932 = vmatmul.mubr.f32.gmra.mrb[0].mxu0 %v718
      %v933 = vpop.f32.mrb[0].mxu0
      %v934 = vadd.f32 %v633, %v933
      %v935 = vpop.f32.mrb[0].mxu0
      %936 = vmatprep.mubr.f32.mxu0 0.0
      %937 = vmatmul.mubr.f32.gmra.mrb[0].mxu0 %v721
      %v938 = vpop.f32.mrb[0].mxu0
      %v939 = vadd.f32 %v633, %v938
      %v940 = vpop.f32.mrb[0].mxu0
      %941 = vmatprep.mubr.f32.mxu0 0.0
      %942 = vmatmul.mubr.f32.gmra.mrb[0].mxu0 %v724
      %v943 = vpop.f32.mrb[0].mxu0
      %v944 = vadd.f32 %v633, %v943
      %v945 = vpop.f32.mrb[0].mxu0
      %946 = vmatprep.mubr.f32.mxu0 0.0
      %947 = vmatmul.mubr.f32.gmra.mrb[0].mxu0 %v727
      %v948 = vpop.f32.mrb[0].mxu0
      %v949 = vadd.f32 %v633, %v948
      %v950 = vpop.f32.mrb[0].mxu0
      %951 = vmatprep.mubr.f32.mxu0 0.0
      %952 = vmatmul.mubr.f32.gmra.mrb[0].mxu0 %v730
      %v953 = vpop.f32.mrb[0].mxu0
      %v954 = vadd.f32 %v633, %v953
      %v955 = vpop.f32.mrb[0].mxu0
      %956 = vdwg.mxu0
      %957 = vst.msk [vmem:[%s226] sm:$0xff] %vm268, %v799
      %958 = vst.msk [vmem:[%s226 + $0x8] sm:$0xff] %vm268, %v804
      %959 = vst.msk [vmem:[%s226 + $0x10] sm:$0xff] %vm268, %v809
      %960 = vst.msk [vmem:[%s226 + $0x18] sm:$0xff] %vm268, %v814
      %961 = vst.msk [vmem:[%s226 + $0x20] sm:$0xff] %vm268, %v819
      %962 = vst.msk [vmem:[%s226 + $0x28] sm:$0xff] %vm268, %v824
      %963 = vst.msk [vmem:[%s226 + $0x30] sm:$0xff] %vm268, %v829
      %964 = vst.msk [vmem:[%s226 + $0x38] sm:$0xff] %vm268, %v834
      %965 = vst.msk [vmem:[%s226 + $0x40] sm:$0xff] %vm268, %v839
      %966 = vst.msk [vmem:[%s226 + $0x48] sm:$0xff] %vm268, %v844
      %967 = vst.msk [vmem:[%s226 + $0x50] sm:$0xff] %vm268, %v849
      %968 = vst.msk [vmem:[%s226 + $0x58] sm:$0xff] %vm268, %v854
      %969 = vst.msk [vmem:[%s226 + $0x60] sm:$0xff] %vm268, %v859
      %970 = vst.msk [vmem:[%s226 + $0x68] sm:$0xff] %vm268, %v864
      %971 = vst.msk [vmem:[%s226 + $0x70] sm:$0xff] %vm268, %v869
      %972 = vst.msk [vmem:[%s226 + $0x78] sm:$0xff] %vm268, %v874
      %973 = vst.msk [vmem:[%s226 + $0x80] sm:$0xff] %vm268, %v879
      %974 = vst.msk [vmem:[%s226 + $0x88] sm:$0xff] %vm268, %v884
      %975 = vst.msk [vmem:[%s226 + $0x90] sm:$0xff] %vm268, %v889
      %976 = vst.msk [vmem:[%s226 + $0x98] sm:$0xff] %vm268, %v894
      %977 = vst.msk [vmem:[%s226 + $0xa0] sm:$0xff] %vm268, %v899
      %978 = vst.msk [vmem:[%s226 + $0xa8] sm:$0xff] %vm268, %v904
      %979 = vst.msk [vmem:[%s226 + $0xb0] sm:$0xff] %vm268, %v909
      %980 = vst.msk [vmem:[%s226 + $0xb8] sm:$0xff] %vm268, %v914
      %981 = vst.msk [vmem:[%s226 + $0xc0] sm:$0xff] %vm268, %v919
      %982 = vst.msk [vmem:[%s226 + $0xc8] sm:$0xff] %vm268, %v924
      %983 = vst.msk [vmem:[%s226 + $0xd0] sm:$0xff] %vm268, %v929
      %984 = vst.msk [vmem:[%s226 + $0xd8] sm:$0xff] %vm268, %v934
      %985 = vst.msk [vmem:[%s226 + $0xe0] sm:$0xff] %vm268, %v939
      %986 = vst.msk [vmem:[%s226 + $0xe8] sm:$0xff] %vm268, %v944
      %987 = vst.msk [vmem:[%s226 + $0xf0] sm:$0xff] %vm268, %v949
      %988 = vst.msk [vmem:[%s226 + $0xf8] sm:$0xff] %vm268, %v954
      %s989 = smul.u32 32, %s16
      %p990 = scmp.lt.s32.totalorder %s989, 63
      %s991 = scalar_select %p990, %s989, 63
      %s992 = smul.addr %s991, 8
      %s993 = scalar_lea.vmem %s5, %s992
      // Predicated region
      $region41: #{spectral_conv2d_forward.5} parent=39 // pred_check
        %p994 = pneg %p144
      $region42: #{spectral_conv2d_forward.5} parent=39 // pred_check_branch
        %996 = sbr.rel (%p994) target = $region44
      $region43: #{spectral_conv2d_forward.5} parent=39 // pred_region
        %s997 = smul.u32 32, %s16
      $region44: #{spectral_conv2d_forward.5} parent=39 // pred_fallthru
        _
    $region40: #{spectral_conv2d_forward.5} parent=5 // pred_fallthru
      _
    %p998 = scmp.le.s32.totalorder 2, %s11
    // Predicated region
    $region45: #{spectral_conv2d_forward.5} parent=5 // pred_check
      %p999 = pneg %p998
    $region46: #{spectral_conv2d_forward.5} parent=5 // pred_check_branch
      %1001 = sbr.rel (%p999) target = $region48
    $region47: #{spectral_conv2d_forward.5} parent=5 // pred_region
      %s1002 = ssub.s32 %s11, 2
      // Predicated region
      $region49: #{spectral_conv2d_forward.5} parent=47 // pred_check
        %p1003 = pneg %p150
      $region50: #{spectral_conv2d_forward.5} parent=47 // pred_check_branch
        %1005 = sbr.rel (%p1003) target = $region52
      $region51: #{spectral_conv2d_forward.5} parent=47 // pred_region
        %s1006 = smul.u32 32, %s17
        %p1007 = scmp.lt.s32.totalorder %s1006, 63
        %s1008 = scalar_select %p1007, %s1006, 63
        %s1009 = smul.addr %s1008, 8
        %s1010 = scalar_lea.vmem %s5, %s1009
      $region52: #{spectral_conv2d_forward.5} parent=47 // pred_fallthru
        _
    $region48: #{spectral_conv2d_forward.5} parent=5 // pred_fallthru
      _
  $region6: #{spectral_conv2d_forward.5} parent=0 // loop_footer
    %s15 = sadd.s32 1, %s11
  $region7: #{spectral_conv2d_forward.5} parent=0 // loop_footer_branch
    %10 = sbr.rel target = $region3
  $region8: #{spectral_conv2d_forward.5} parent=0 // loop_exit
    _

</llo_original>
